<compile_context>
chip_gen: v6e
topology: v6e:2x2x1
jax: 0.10.0
libtpu: 0.0.40
codegen_flags: <defaults>
</compile_context>

<pallas_src>
import math

import jax
import jax.numpy as jnp
from jax.experimental import pallas as pl
from jax.experimental.pallas import tpu as pltpu

# ---- module hyper-parameters (NeuralODEvar defaults) -----------------------
T_FINAL = 10.0      # final time T
TIME_STEPS = 10     # Semiflow Euler steps == trajectory length
NUM_PARAMS = 5      # num_params -> number of Linear blocks in Dynamics.fc2_time
N_GRID = TIME_STEPS + 1
DT = T_FINAL / TIME_STEPS            # Euler step (== 1.0 for these defaults)

DATA_DIM = 32       # data_dim == hidden_dim (required by 'inside' architecture)
HIDDEN_DIM = 32
OUTPUT_DIM = 2
O_PAD = 128         # output dim zero-padded to a full lane width (unmasked vst)
BATCH = 8


# ---------------------------------------------------------------------------
# Fused kernel: Euler flow -> VMEM scratch -> one projection -> interpolation
# ---------------------------------------------------------------------------
def fused_neural_ode_kernel(x_ref, wdyn_ref, bdyn_ref, wout_ref, bout_ref,
                            proj_ref, grid_ref):
    # x_ref    : (B, D)                 initial condition
    # wdyn_ref : (NUM_PARAMS, D, D)     fc2_time[k].weight, PRE-TRANSPOSED (in, out)
    # bdyn_ref : (NUM_PARAMS, 1, D)     fc2_time[k].bias
    # wout_ref : (D, O_PAD)             linear_layer.weight^T, zero-padded to 128 lanes
    # bout_ref : (1, O_PAD)             linear_layer.bias, zero-padded
    # proj_ref : (TIME_STEPS, B, O_PAD) linear_layer(trajectory), lane-dense
    # grid_ref : (N_GRID*B, D)          VMEM scratch holding all Euler states
    B, D = x_ref.shape

    x = x_ref[...].astype(jnp.float32)
    grid_ref[0:B, :] = x                         # state at t = 0

    # ---- forward Euler, fully unrolled; k / dt folding are compile-time ----
    prev_k = -1
    w_k = None
    b_k = None
    for step in range(TIME_STEPS):
        # control switching: k = int(t / (T / num_params)) with t = step*DT
        k = (step * NUM_PARAMS) // TIME_STEPS
        if k != prev_k:
            # load each (W_k, b_k) exactly once; fold dt; pre-broadcast bias
            # to (B, D) so the unrolled steps contain no broadcast_in_dim.
            w_k = wdyn_ref[k].astype(jnp.float32)                 # (D, D)
            b_k = jnp.broadcast_to(bdyn_ref[k].astype(jnp.float32), (B, D))
            if DT != 1.0:                                         # compile-time
                w_k = w_k * jnp.float32(DT)
                b_k = b_k * jnp.float32(DT)
            prev_k = k
        # architecture 'inside' (< 0): x <- x + dt*(tanh(x) @ W_k^T + b_k)
        x = x + (jnp.dot(jnp.tanh(x), w_k,
                         preferred_element_type=jnp.float32) + b_k)
        grid_ref[(step + 1) * B:(step + 2) * B, :] = x            # off-chain store

    # ---- single projection of the whole Euler grid (one MXU matmul) --------
    wout = wout_ref[...].astype(jnp.float32)                      # (D, O_PAD)
    bout = bout_ref[...].astype(jnp.float32)                      # (1, O_PAD)
    pg = jnp.dot(grid_ref[...], wout,
                 preferred_element_type=jnp.float32) + bout       # (N_GRID*B, O_PAD)

    # ---- fixed-grid linear interpolation, done in the (cheap) projected
    # space: projection is affine and lerp weights sum to 1, so it commutes.
    # eval_times = linspace(0, T, TIME_STEPS); idx/frac are Python constants.
    for j in range(TIME_STEPS):
        t_eval = j * T_FINAL / (TIME_STEPS - 1)
        pos = t_eval / DT
        idx = min(int(math.floor(pos)), N_GRID - 2)
        frac = pos - idx
        lo = pg[idx * B:(idx + 1) * B, :]
        if frac <= 0.0:
            val = lo
        elif frac >= 1.0:
            val = pg[(idx + 1) * B:(idx + 2) * B, :]
        else:
            hi = pg[(idx + 1) * B:(idx + 2) * B, :]
            val = lo + jnp.float32(frac) * (hi - lo)
        proj_ref[j, :, :] = val.astype(proj_ref.dtype)


# ---------------------------------------------------------------------------
# Wrapper
# ---------------------------------------------------------------------------
_VMEM = pl.BlockSpec(memory_space=pltpu.MemorySpace.VMEM)


@jax.jit
def neural_ode_var_forward(x, params):
    """Reproduces NeuralODEvar.forward(x) -> (pred, proj_traj)."""
    B, D = x.shape

    # Free, parameter-only layout plumbing (done in the wrapper):
    #  - pre-transpose PyTorch-style (out, in) weights to (in, out),
    #  - zero-pad the tiny output projection to a full 128-lane slab so the
    #    kernel's output stores are lane-dense / unmasked.
    w_dyn_t = jnp.swapaxes(params["w_dyn"], 1, 2)                  # (K, D_in, D_out)
    w_out_pad = jnp.zeros((D, O_PAD), jnp.float32).at[:, :OUTPUT_DIM].set(
        params["w_out"].T)                                         # (D, O_PAD)
    b_out_pad = jnp.zeros((1, O_PAD), jnp.float32).at[:, :OUTPUT_DIM].set(
        params["b_out"])                                           # (1, O_PAD)

    proj_pad = pl.pallas_call(
        fused_neural_ode_kernel,
        out_shape=jax.ShapeDtypeStruct((TIME_STEPS, B, O_PAD), jnp.float32),
        in_specs=[_VMEM, _VMEM, _VMEM, _VMEM, _VMEM],
        out_specs=_VMEM,
        scratch_shapes=[pltpu.VMEM((N_GRID * B, D), jnp.float32)],
    )(x, w_dyn_t, params["b_dyn"], w_out_pad, b_out_pad)

    proj_traj = proj_pad[:, :, :OUTPUT_DIM]      # drop lane padding (XLA slice)
    pred = proj_traj[-1]                         # eval_times[-1] == T  =>  pred
    return pred, proj_traj


# ---------------------------------------------------------------------------
# Pure-JAX reference (mirrors the PyTorch forward) for a sanity check
# ---------------------------------------------------------------------------
def _reference_forward(x, params):
    hp = jax.lax.Precision.HIGHEST
    grid = [x]
    for step in range(TIME_STEPS):
        k = (step * NUM_PARAMS) // TIME_STEPS
        w = params["w_dyn"][k]                   # (out, in) torch layout
        b = params["b_dyn"][k]                   # (1, D)
        f = jnp.dot(jnp.tanh(grid[-1]), w.T, precision=hp) + b
        grid.append(grid[-1] + DT * f)
    traj = []
    for j in range(TIME_STEPS):
        t_eval = j * T_FINAL / (TIME_STEPS - 1)
        pos = t_eval / DT
        idx = min(int(math.floor(pos)), N_GRID - 2)
        frac = pos - idx
        if frac <= 0.0:
            s = grid[idx]
        elif frac >= 1.0:
            s = grid[idx + 1]
        else:
            s = grid[idx] + frac * (grid[idx + 1] - grid[idx])
        traj.append(s)
    traj = jnp.stack(traj)                       # (TIME_STEPS, B, D)
    proj = jnp.dot(traj, params["w_out"].T, precision=hp) + params["b_out"]
    pred = jnp.dot(grid[-1], params["w_out"].T, precision=hp) + params["b_out"]
    return pred, proj


def init_params(key):
    """Deterministic synthetic init (PyTorch Linear-style uniform bounds)."""
    k1, k2, k3, k4 = jax.random.split(key, 4)
    bound_dyn = 1.0 / jnp.sqrt(HIDDEN_DIM)
    bound_out = 1.0 / jnp.sqrt(DATA_DIM)
    return {
        # Dynamics.fc2_time: NUM_PARAMS x Linear(hidden_dim, hidden_dim)
        "w_dyn": jax.random.uniform(k1, (NUM_PARAMS, HIDDEN_DIM, HIDDEN_DIM),
                                    jnp.float32, -bound_dyn, bound_dyn),
        "b_dyn": jax.random.uniform(k2, (NUM_PARAMS, 1, HIDDEN_DIM),
                                    jnp.float32, -bound_dyn, bound_dyn),
        # NeuralODEvar.linear_layer: Linear(input_dim, output_dim)
        "w_out": jax.random.uniform(k3, (OUTPUT_DIM, DATA_DIM),
                                    jnp.float32, -bound_out, bound_out),
        "b_out": jax.random.uniform(k4, (1, OUTPUT_DIM),
                                    jnp.float32, -bound_out, bound_out),
    }


if __name__ == "__main__":
    key = jax.random.PRNGKey(0)
    kx, kp = jax.random.split(key)
    x = jax.random.normal(kx, (BATCH, DATA_DIM), jnp.float32)
    params = init_params(kp)

    pred, proj_traj = neural_ode_var_forward(x, params)
    jax.block_until_ready((pred, proj_traj))

    assert pred.shape == (BATCH, OUTPUT_DIM)
    assert proj_traj.shape == (TIME_STEPS, BATCH, OUTPUT_DIM)
    assert bool(jnp.all(jnp.isfinite(pred)))
    assert bool(jnp.all(jnp.isfinite(proj_traj)))

    # sanity check against a pure-JAX implementation of the same forward pass
    pred_ref, proj_ref = _reference_forward(x, params)
    assert bool(jnp.allclose(pred, pred_ref, rtol=1e-2, atol=1e-2))
    assert bool(jnp.allclose(proj_traj, proj_ref, rtol=1e-2, atol=1e-2))
    # eval_times[-1] == T  =>  pred must equal the last trajectory projection.
    assert bool(jnp.allclose(pred, proj_traj[-1]))
    print("KERNEL_OK")
</pallas_src>

<mosaic_0001>
module attributes {stable_mosaic.version = 11 : i64} {
  func.func @fused_neural_ode_kernel(%arg0: memref<8x32xf32, #tpu.memory_space<vmem>>, %arg1: memref<5x32x32xf32, #tpu.memory_space<vmem>>, %arg2: memref<5x1x32xf32, #tpu.memory_space<vmem>>, %arg3: memref<32x128xf32, #tpu.memory_space<vmem>>, %arg4: memref<1x128xf32, #tpu.memory_space<vmem>>, %arg5: memref<10x8x128xf32, #tpu.memory_space<vmem>>, %arg6: memref<88x32xf32, #tpu.memory_space<vmem>>) attributes {dimension_semantics = [], scalar_prefetch = 0 : i64, scratch_operands = 1 : i64, tpu.core_type = #tpu.core_type<tc>} {
    %c0 = arith.constant 0 : index
    %c0_0 = arith.constant 0 : index
    %0 = vector.load %arg0[%c0, %c0_0] : memref<8x32xf32, #tpu.memory_space<vmem>>, vector<8x32xf32>
    %c0_1 = arith.constant 0 : index
    %c0_2 = arith.constant 0 : index
    %1 = vector.load %arg6[%c0_1, %c0_2] : memref<88x32xf32, #tpu.memory_space<vmem>>, vector<8x32xf32>
    tpu.vector_store %arg6[%c0_1, %c0_2], %0 {strides = array<i32>} : memref<88x32xf32, #tpu.memory_space<vmem>>, vector<8x32xf32>,
    %c0_3 = arith.constant 0 : index
    %c0_4 = arith.constant 0 : index
    %c0_5 = arith.constant 0 : index
    %2 = vector.load %arg1[%c0_3, %c0_4, %c0_5] : memref<5x32x32xf32, #tpu.memory_space<vmem>>, vector<1x32x32xf32>
    %3 = vector.shape_cast %2 : vector<1x32x32xf32> to vector<32x32xf32>
    %c0_6 = arith.constant 0 : index
    %c0_7 = arith.constant 0 : index
    %c0_8 = arith.constant 0 : index
    %4 = vector.load %arg2[%c0_6, %c0_7, %c0_8] : memref<5x1x32xf32, #tpu.memory_space<vmem>>, vector<1x1x32xf32>
    %5 = vector.shape_cast %4 : vector<1x1x32xf32> to vector<1x32xf32>
    %6 = vector.shape_cast %5 : vector<1x32xf32> to vector<1x32xf32>
    %7 = vector.broadcast %6 : vector<1x32xf32> to vector<8x32xf32>
    %8 = math.tanh %0 : vector<8x32xf32>
    %cst = arith.constant dense<0.000000e+00> : vector<8x32xf32>
    %9 = tpu.matmul %8, %3, %cst {dimension_numbers = #tpu.dot_dimension_numbers<[1], [0], [0], [1], [0, 0, 1, 1], [], []>} : vector<8x32xf32>, vector<32x32xf32>, vector<8x32xf32> -> vector<8x32xf32>
    %10 = arith.addf %9, %7 : vector<8x32xf32>
    %11 = arith.addf %0, %10 : vector<8x32xf32>
    %c8 = arith.constant 8 : index
    %c0_9 = arith.constant 0 : index
    %12 = vector.load %arg6[%c8, %c0_9] : memref<88x32xf32, #tpu.memory_space<vmem>>, vector<8x32xf32>
    tpu.vector_store %arg6[%c8, %c0_9], %11 {strides = array<i32>} : memref<88x32xf32, #tpu.memory_space<vmem>>, vector<8x32xf32>,
    %13 = math.tanh %11 : vector<8x32xf32>
    %cst_10 = arith.constant dense<0.000000e+00> : vector<8x32xf32>
    %14 = tpu.matmul %13, %3, %cst_10 {dimension_numbers = #tpu.dot_dimension_numbers<[1], [0], [0], [1], [0, 0, 1, 1], [], []>} : vector<8x32xf32>, vector<32x32xf32>, vector<8x32xf32> -> vector<8x32xf32>
    %15 = arith.addf %14, %7 : vector<8x32xf32>
    %16 = arith.addf %11, %15 : vector<8x32xf32>
    %c16 = arith.constant 16 : index
    %c0_11 = arith.constant 0 : index
    %17 = vector.load %arg6[%c16, %c0_11] : memref<88x32xf32, #tpu.memory_space<vmem>>, vector<8x32xf32>
    tpu.vector_store %arg6[%c16, %c0_11], %16 {strides = array<i32>} : memref<88x32xf32, #tpu.memory_space<vmem>>, vector<8x32xf32>,
    %c1 = arith.constant 1 : index
    %c0_12 = arith.constant 0 : index
    %c0_13 = arith.constant 0 : index
    %18 = vector.load %arg1[%c1, %c0_12, %c0_13] : memref<5x32x32xf32, #tpu.memory_space<vmem>>, vector<1x32x32xf32>
    %19 = vector.shape_cast %18 : vector<1x32x32xf32> to vector<32x32xf32>
    %c1_14 = arith.constant 1 : index
    %c0_15 = arith.constant 0 : index
    %c0_16 = arith.constant 0 : index
    %20 = vector.load %arg2[%c1_14, %c0_15, %c0_16] : memref<5x1x32xf32, #tpu.memory_space<vmem>>, vector<1x1x32xf32>
    %21 = vector.shape_cast %20 : vector<1x1x32xf32> to vector<1x32xf32>
    %22 = vector.shape_cast %21 : vector<1x32xf32> to vector<1x32xf32>
    %23 = vector.broadcast %22 : vector<1x32xf32> to vector<8x32xf32>
    %24 = math.tanh %16 : vector<8x32xf32>
    %cst_17 = arith.constant dense<0.000000e+00> : vector<8x32xf32>
    %25 = tpu.matmul %24, %19, %cst_17 {dimension_numbers = #tpu.dot_dimension_numbers<[1], [0], [0], [1], [0, 0, 1, 1], [], []>} : vector<8x32xf32>, vector<32x32xf32>, vector<8x32xf32> -> vector<8x32xf32>
    %26 = arith.addf %25, %23 : vector<8x32xf32>
    %27 = arith.addf %16, %26 : vector<8x32xf32>
    %c24 = arith.constant 24 : index
    %c0_18 = arith.constant 0 : index
    %28 = vector.load %arg6[%c24, %c0_18] : memref<88x32xf32, #tpu.memory_space<vmem>>, vector<8x32xf32>
    tpu.vector_store %arg6[%c24, %c0_18], %27 {strides = array<i32>} : memref<88x32xf32, #tpu.memory_space<vmem>>, vector<8x32xf32>,
    %29 = math.tanh %27 : vector<8x32xf32>
    %cst_19 = arith.constant dense<0.000000e+00> : vector<8x32xf32>
    %30 = tpu.matmul %29, %19, %cst_19 {dimension_numbers = #tpu.dot_dimension_numbers<[1], [0], [0], [1], [0, 0, 1, 1], [], []>} : vector<8x32xf32>, vector<32x32xf32>, vector<8x32xf32> -> vector<8x32xf32>
    %31 = arith.addf %30, %23 : vector<8x32xf32>
    %32 = arith.addf %27, %31 : vector<8x32xf32>
    %c32 = arith.constant 32 : index
    %c0_20 = arith.constant 0 : index
    %33 = vector.load %arg6[%c32, %c0_20] : memref<88x32xf32, #tpu.memory_space<vmem>>, vector<8x32xf32>
    tpu.vector_store %arg6[%c32, %c0_20], %32 {strides = array<i32>} : memref<88x32xf32, #tpu.memory_space<vmem>>, vector<8x32xf32>,
    %c2 = arith.constant 2 : index
    %c0_21 = arith.constant 0 : index
    %c0_22 = arith.constant 0 : index
    %34 = vector.load %arg1[%c2, %c0_21, %c0_22] : memref<5x32x32xf32, #tpu.memory_space<vmem>>, vector<1x32x32xf32>
    %35 = vector.shape_cast %34 : vector<1x32x32xf32> to vector<32x32xf32>
    %c2_23 = arith.constant 2 : index
    %c0_24 = arith.constant 0 : index
    %c0_25 = arith.constant 0 : index
    %36 = vector.load %arg2[%c2_23, %c0_24, %c0_25] : memref<5x1x32xf32, #tpu.memory_space<vmem>>, vector<1x1x32xf32>
    %37 = vector.shape_cast %36 : vector<1x1x32xf32> to vector<1x32xf32>
    %38 = vector.shape_cast %37 : vector<1x32xf32> to vector<1x32xf32>
    %39 = vector.broadcast %38 : vector<1x32xf32> to vector<8x32xf32>
    %40 = math.tanh %32 : vector<8x32xf32>
    %cst_26 = arith.constant dense<0.000000e+00> : vector<8x32xf32>
    %41 = tpu.matmul %40, %35, %cst_26 {dimension_numbers = #tpu.dot_dimension_numbers<[1], [0], [0], [1], [0, 0, 1, 1], [], []>} : vector<8x32xf32>, vector<32x32xf32>, vector<8x32xf32> -> vector<8x32xf32>
    %42 = arith.addf %41, %39 : vector<8x32xf32>
    %43 = arith.addf %32, %42 : vector<8x32xf32>
    %c40 = arith.constant 40 : index
    %c0_27 = arith.constant 0 : index
    %44 = vector.load %arg6[%c40, %c0_27] : memref<88x32xf32, #tpu.memory_space<vmem>>, vector<8x32xf32>
    tpu.vector_store %arg6[%c40, %c0_27], %43 {strides = array<i32>} : memref<88x32xf32, #tpu.memory_space<vmem>>, vector<8x32xf32>,
    %45 = math.tanh %43 : vector<8x32xf32>
    %cst_28 = arith.constant dense<0.000000e+00> : vector<8x32xf32>
    %46 = tpu.matmul %45, %35, %cst_28 {dimension_numbers = #tpu.dot_dimension_numbers<[1], [0], [0], [1], [0, 0, 1, 1], [], []>} : vector<8x32xf32>, vector<32x32xf32>, vector<8x32xf32> -> vector<8x32xf32>
    %47 = arith.addf %46, %39 : vector<8x32xf32>
    %48 = arith.addf %43, %47 : vector<8x32xf32>
    %c48 = arith.constant 48 : index
    %c0_29 = arith.constant 0 : index
    %49 = vector.load %arg6[%c48, %c0_29] : memref<88x32xf32, #tpu.memory_space<vmem>>, vector<8x32xf32>
    tpu.vector_store %arg6[%c48, %c0_29], %48 {strides = array<i32>} : memref<88x32xf32, #tpu.memory_space<vmem>>, vector<8x32xf32>,
    %c3 = arith.constant 3 : index
    %c0_30 = arith.constant 0 : index
    %c0_31 = arith.constant 0 : index
    %50 = vector.load %arg1[%c3, %c0_30, %c0_31] : memref<5x32x32xf32, #tpu.memory_space<vmem>>, vector<1x32x32xf32>
    %51 = vector.shape_cast %50 : vector<1x32x32xf32> to vector<32x32xf32>
    %c3_32 = arith.constant 3 : index
    %c0_33 = arith.constant 0 : index
    %c0_34 = arith.constant 0 : index
    %52 = vector.load %arg2[%c3_32, %c0_33, %c0_34] : memref<5x1x32xf32, #tpu.memory_space<vmem>>, vector<1x1x32xf32>
    %53 = vector.shape_cast %52 : vector<1x1x32xf32> to vector<1x32xf32>
    %54 = vector.shape_cast %53 : vector<1x32xf32> to vector<1x32xf32>
    %55 = vector.broadcast %54 : vector<1x32xf32> to vector<8x32xf32>
    %56 = math.tanh %48 : vector<8x32xf32>
    %cst_35 = arith.constant dense<0.000000e+00> : vector<8x32xf32>
    %57 = tpu.matmul %56, %51, %cst_35 {dimension_numbers = #tpu.dot_dimension_numbers<[1], [0], [0], [1], [0, 0, 1, 1], [], []>} : vector<8x32xf32>, vector<32x32xf32>, vector<8x32xf32> -> vector<8x32xf32>
    %58 = arith.addf %57, %55 : vector<8x32xf32>
    %59 = arith.addf %48, %58 : vector<8x32xf32>
    %c56 = arith.constant 56 : index
    %c0_36 = arith.constant 0 : index
    %60 = vector.load %arg6[%c56, %c0_36] : memref<88x32xf32, #tpu.memory_space<vmem>>, vector<8x32xf32>
    tpu.vector_store %arg6[%c56, %c0_36], %59 {strides = array<i32>} : memref<88x32xf32, #tpu.memory_space<vmem>>, vector<8x32xf32>,
    %61 = math.tanh %59 : vector<8x32xf32>
    %cst_37 = arith.constant dense<0.000000e+00> : vector<8x32xf32>
    %62 = tpu.matmul %61, %51, %cst_37 {dimension_numbers = #tpu.dot_dimension_numbers<[1], [0], [0], [1], [0, 0, 1, 1], [], []>} : vector<8x32xf32>, vector<32x32xf32>, vector<8x32xf32> -> vector<8x32xf32>
    %63 = arith.addf %62, %55 : vector<8x32xf32>
    %64 = arith.addf %59, %63 : vector<8x32xf32>
    %c64 = arith.constant 64 : index
    %c0_38 = arith.constant 0 : index
    %65 = vector.load %arg6[%c64, %c0_38] : memref<88x32xf32, #tpu.memory_space<vmem>>, vector<8x32xf32>
    tpu.vector_store %arg6[%c64, %c0_38], %64 {strides = array<i32>} : memref<88x32xf32, #tpu.memory_space<vmem>>, vector<8x32xf32>,
    %c4 = arith.constant 4 : index
    %c0_39 = arith.constant 0 : index
    %c0_40 = arith.constant 0 : index
    %66 = vector.load %arg1[%c4, %c0_39, %c0_40] : memref<5x32x32xf32, #tpu.memory_space<vmem>>, vector<1x32x32xf32>
    %67 = vector.shape_cast %66 : vector<1x32x32xf32> to vector<32x32xf32>
    %c4_41 = arith.constant 4 : index
    %c0_42 = arith.constant 0 : index
    %c0_43 = arith.constant 0 : index
    %68 = vector.load %arg2[%c4_41, %c0_42, %c0_43] : memref<5x1x32xf32, #tpu.memory_space<vmem>>, vector<1x1x32xf32>
    %69 = vector.shape_cast %68 : vector<1x1x32xf32> to vector<1x32xf32>
    %70 = vector.shape_cast %69 : vector<1x32xf32> to vector<1x32xf32>
    %71 = vector.broadcast %70 : vector<1x32xf32> to vector<8x32xf32>
    %72 = math.tanh %64 : vector<8x32xf32>
    %cst_44 = arith.constant dense<0.000000e+00> : vector<8x32xf32>
    %73 = tpu.matmul %72, %67, %cst_44 {dimension_numbers = #tpu.dot_dimension_numbers<[1], [0], [0], [1], [0, 0, 1, 1], [], []>} : vector<8x32xf32>, vector<32x32xf32>, vector<8x32xf32> -> vector<8x32xf32>
    %74 = arith.addf %73, %71 : vector<8x32xf32>
    %75 = arith.addf %64, %74 : vector<8x32xf32>
    %c72 = arith.constant 72 : index
    %c0_45 = arith.constant 0 : index
    %76 = vector.load %arg6[%c72, %c0_45] : memref<88x32xf32, #tpu.memory_space<vmem>>, vector<8x32xf32>
    tpu.vector_store %arg6[%c72, %c0_45], %75 {strides = array<i32>} : memref<88x32xf32, #tpu.memory_space<vmem>>, vector<8x32xf32>,
    %77 = math.tanh %75 : vector<8x32xf32>
    %cst_46 = arith.constant dense<0.000000e+00> : vector<8x32xf32>
    %78 = tpu.matmul %77, %67, %cst_46 {dimension_numbers = #tpu.dot_dimension_numbers<[1], [0], [0], [1], [0, 0, 1, 1], [], []>} : vector<8x32xf32>, vector<32x32xf32>, vector<8x32xf32> -> vector<8x32xf32>
    %79 = arith.addf %78, %71 : vector<8x32xf32>
    %80 = arith.addf %75, %79 : vector<8x32xf32>
    %c80 = arith.constant 80 : index
    %c0_47 = arith.constant 0 : index
    %81 = vector.load %arg6[%c80, %c0_47] : memref<88x32xf32, #tpu.memory_space<vmem>>, vector<8x32xf32>
    tpu.vector_store %arg6[%c80, %c0_47], %80 {strides = array<i32>} : memref<88x32xf32, #tpu.memory_space<vmem>>, vector<8x32xf32>,
    %c0_48 = arith.constant 0 : index
    %c0_49 = arith.constant 0 : index
    %82 = vector.load %arg3[%c0_48, %c0_49] : memref<32x128xf32, #tpu.memory_space<vmem>>, vector<32x128xf32>
    %c0_50 = arith.constant 0 : index
    %c0_51 = arith.constant 0 : index
    %83 = vector.load %arg4[%c0_50, %c0_51] : memref<1x128xf32, #tpu.memory_space<vmem>>, vector<1x128xf32>
    %c0_52 = arith.constant 0 : index
    %c0_53 = arith.constant 0 : index
    %84 = vector.load %arg6[%c0_52, %c0_53] : memref<88x32xf32, #tpu.memory_space<vmem>>, vector<88x32xf32>
    %cst_54 = arith.constant dense<0.000000e+00> : vector<88x128xf32>
    %85 = tpu.matmul %84, %82, %cst_54 {dimension_numbers = #tpu.dot_dimension_numbers<[1], [0], [0], [1], [0, 0, 1, 1], [], []>} : vector<88x32xf32>, vector<32x128xf32>, vector<88x128xf32> -> vector<88x128xf32>
    %86 = vector.broadcast %83 : vector<1x128xf32> to vector<88x128xf32>
    %87 = arith.addf %85, %86 : vector<88x128xf32>
    %88 = vector.extract_strided_slice %87 {offsets = [0, 0], sizes = [8, 128], strides = [1, 1]} : vector<88x128xf32> to vector<8x128xf32>
    %c0_55 = arith.constant 0 : index
    %c0_56 = arith.constant 0 : index
    %c0_57 = arith.constant 0 : index
    %89 = vector.load %arg5[%c0_55, %c0_56, %c0_57] : memref<10x8x128xf32, #tpu.memory_space<vmem>>, vector<1x8x128xf32>
    %90 = vector.shape_cast %89 : vector<1x8x128xf32> to vector<8x128xf32>
    %91 = vector.shape_cast %88 : vector<8x128xf32> to vector<1x8x128xf32>
    tpu.vector_store %arg5[%c0_55, %c0_56, %c0_57], %91 {strides = array<i32>} : memref<10x8x128xf32, #tpu.memory_space<vmem>>, vector<1x8x128xf32>,
    %92 = vector.extract_strided_slice %87 {offsets = [8, 0], sizes = [8, 128], strides = [1, 1]} : vector<88x128xf32> to vector<8x128xf32>
    %93 = vector.extract_strided_slice %87 {offsets = [16, 0], sizes = [8, 128], strides = [1, 1]} : vector<88x128xf32> to vector<8x128xf32>
    %94 = arith.subf %93, %92 : vector<8x128xf32>
    %cst_58 = arith.constant 0.111111112 : f32
    %95 = vector.broadcast %cst_58 : f32 to vector<8x128xf32>
    %96 = arith.mulf %95, %94 : vector<8x128xf32>
    %97 = arith.addf %92, %96 : vector<8x128xf32>
    %c1_59 = arith.constant 1 : index
    %c0_60 = arith.constant 0 : index
    %c0_61 = arith.constant 0 : index
    %98 = vector.load %arg5[%c1_59, %c0_60, %c0_61] : memref<10x8x128xf32, #tpu.memory_space<vmem>>, vector<1x8x128xf32>
    %99 = vector.shape_cast %98 : vector<1x8x128xf32> to vector<8x128xf32>
    %100 = vector.shape_cast %97 : vector<8x128xf32> to vector<1x8x128xf32>
    tpu.vector_store %arg5[%c1_59, %c0_60, %c0_61], %100 {strides = array<i32>} : memref<10x8x128xf32, #tpu.memory_space<vmem>>, vector<1x8x128xf32>,
    %101 = vector.extract_strided_slice %87 {offsets = [16, 0], sizes = [8, 128], strides = [1, 1]} : vector<88x128xf32> to vector<8x128xf32>
    %102 = vector.extract_strided_slice %87 {offsets = [24, 0], sizes = [8, 128], strides = [1, 1]} : vector<88x128xf32> to vector<8x128xf32>
    %103 = arith.subf %102, %101 : vector<8x128xf32>
    %cst_62 = arith.constant 0.222222224 : f32
    %104 = vector.broadcast %cst_62 : f32 to vector<8x128xf32>
    %105 = arith.mulf %104, %103 : vector<8x128xf32>
    %106 = arith.addf %101, %105 : vector<8x128xf32>
    %c2_63 = arith.constant 2 : index
    %c0_64 = arith.constant 0 : index
    %c0_65 = arith.constant 0 : index
    %107 = vector.load %arg5[%c2_63, %c0_64, %c0_65] : memref<10x8x128xf32, #tpu.memory_space<vmem>>, vector<1x8x128xf32>
    %108 = vector.shape_cast %107 : vector<1x8x128xf32> to vector<8x128xf32>
    %109 = vector.shape_cast %106 : vector<8x128xf32> to vector<1x8x128xf32>
    tpu.vector_store %arg5[%c2_63, %c0_64, %c0_65], %109 {strides = array<i32>} : memref<10x8x128xf32, #tpu.memory_space<vmem>>, vector<1x8x128xf32>,
    %110 = vector.extract_strided_slice %87 {offsets = [24, 0], sizes = [8, 128], strides = [1, 1]} : vector<88x128xf32> to vector<8x128xf32>
    %111 = vector.extract_strided_slice %87 {offsets = [32, 0], sizes = [8, 128], strides = [1, 1]} : vector<88x128xf32> to vector<8x128xf32>
    %112 = arith.subf %111, %110 : vector<8x128xf32>
    %cst_66 = arith.constant 0.333333343 : f32
    %113 = vector.broadcast %cst_66 : f32 to vector<8x128xf32>
    %114 = arith.mulf %113, %112 : vector<8x128xf32>
    %115 = arith.addf %110, %114 : vector<8x128xf32>
    %c3_67 = arith.constant 3 : index
    %c0_68 = arith.constant 0 : index
    %c0_69 = arith.constant 0 : index
    %116 = vector.load %arg5[%c3_67, %c0_68, %c0_69] : memref<10x8x128xf32, #tpu.memory_space<vmem>>, vector<1x8x128xf32>
    %117 = vector.shape_cast %116 : vector<1x8x128xf32> to vector<8x128xf32>
    %118 = vector.shape_cast %115 : vector<8x128xf32> to vector<1x8x128xf32>
    tpu.vector_store %arg5[%c3_67, %c0_68, %c0_69], %118 {strides = array<i32>} : memref<10x8x128xf32, #tpu.memory_space<vmem>>, vector<1x8x128xf32>,
    %119 = vector.extract_strided_slice %87 {offsets = [32, 0], sizes = [8, 128], strides = [1, 1]} : vector<88x128xf32> to vector<8x128xf32>
    %120 = vector.extract_strided_slice %87 {offsets = [40, 0], sizes = [8, 128], strides = [1, 1]} : vector<88x128xf32> to vector<8x128xf32>
    %121 = arith.subf %120, %119 : vector<8x128xf32>
    %cst_70 = arith.constant 0.444444448 : f32
    %122 = vector.broadcast %cst_70 : f32 to vector<8x128xf32>
    %123 = arith.mulf %122, %121 : vector<8x128xf32>
    %124 = arith.addf %119, %123 : vector<8x128xf32>
    %c4_71 = arith.constant 4 : index
    %c0_72 = arith.constant 0 : index
    %c0_73 = arith.constant 0 : index
    %125 = vector.load %arg5[%c4_71, %c0_72, %c0_73] : memref<10x8x128xf32, #tpu.memory_space<vmem>>, vector<1x8x128xf32>
    %126 = vector.shape_cast %125 : vector<1x8x128xf32> to vector<8x128xf32>
    %127 = vector.shape_cast %124 : vector<8x128xf32> to vector<1x8x128xf32>
    tpu.vector_store %arg5[%c4_71, %c0_72, %c0_73], %127 {strides = array<i32>} : memref<10x8x128xf32, #tpu.memory_space<vmem>>, vector<1x8x128xf32>,
    %128 = vector.extract_strided_slice %87 {offsets = [40, 0], sizes = [8, 128], strides = [1, 1]} : vector<88x128xf32> to vector<8x128xf32>
    %129 = vector.extract_strided_slice %87 {offsets = [48, 0], sizes = [8, 128], strides = [1, 1]} : vector<88x128xf32> to vector<8x128xf32>
    %130 = arith.subf %129, %128 : vector<8x128xf32>
    %cst_74 = arith.constant 0.555555582 : f32
    %131 = vector.broadcast %cst_74 : f32 to vector<8x128xf32>
    %132 = arith.mulf %131, %130 : vector<8x128xf32>
    %133 = arith.addf %128, %132 : vector<8x128xf32>
    %c5 = arith.constant 5 : index
    %c0_75 = arith.constant 0 : index
    %c0_76 = arith.constant 0 : index
    %134 = vector.load %arg5[%c5, %c0_75, %c0_76] : memref<10x8x128xf32, #tpu.memory_space<vmem>>, vector<1x8x128xf32>
    %135 = vector.shape_cast %134 : vector<1x8x128xf32> to vector<8x128xf32>
    %136 = vector.shape_cast %133 : vector<8x128xf32> to vector<1x8x128xf32>
    tpu.vector_store %arg5[%c5, %c0_75, %c0_76], %136 {strides = array<i32>} : memref<10x8x128xf32, #tpu.memory_space<vmem>>, vector<1x8x128xf32>,
    %137 = vector.extract_strided_slice %87 {offsets = [48, 0], sizes = [8, 128], strides = [1, 1]} : vector<88x128xf32> to vector<8x128xf32>
    %138 = vector.extract_strided_slice %87 {offsets = [56, 0], sizes = [8, 128], strides = [1, 1]} : vector<88x128xf32> to vector<8x128xf32>
    %139 = arith.subf %138, %137 : vector<8x128xf32>
    %cst_77 = arith.constant 0.666666686 : f32
    %140 = vector.broadcast %cst_77 : f32 to vector<8x128xf32>
    %141 = arith.mulf %140, %139 : vector<8x128xf32>
    %142 = arith.addf %137, %141 : vector<8x128xf32>
    %c6 = arith.constant 6 : index
    %c0_78 = arith.constant 0 : index
    %c0_79 = arith.constant 0 : index
    %143 = vector.load %arg5[%c6, %c0_78, %c0_79] : memref<10x8x128xf32, #tpu.memory_space<vmem>>, vector<1x8x128xf32>
    %144 = vector.shape_cast %143 : vector<1x8x128xf32> to vector<8x128xf32>
    %145 = vector.shape_cast %142 : vector<8x128xf32> to vector<1x8x128xf32>
    tpu.vector_store %arg5[%c6, %c0_78, %c0_79], %145 {strides = array<i32>} : memref<10x8x128xf32, #tpu.memory_space<vmem>>, vector<1x8x128xf32>,
    %146 = vector.extract_strided_slice %87 {offsets = [56, 0], sizes = [8, 128], strides = [1, 1]} : vector<88x128xf32> to vector<8x128xf32>
    %147 = vector.extract_strided_slice %87 {offsets = [64, 0], sizes = [8, 128], strides = [1, 1]} : vector<88x128xf32> to vector<8x128xf32>
    %148 = arith.subf %147, %146 : vector<8x128xf32>
    %cst_80 = arith.constant 0.777777791 : f32
    %149 = vector.broadcast %cst_80 : f32 to vector<8x128xf32>
    %150 = arith.mulf %149, %148 : vector<8x128xf32>
    %151 = arith.addf %146, %150 : vector<8x128xf32>
    %c7 = arith.constant 7 : index
    %c0_81 = arith.constant 0 : index
    %c0_82 = arith.constant 0 : index
    %152 = vector.load %arg5[%c7, %c0_81, %c0_82] : memref<10x8x128xf32, #tpu.memory_space<vmem>>, vector<1x8x128xf32>
    %153 = vector.shape_cast %152 : vector<1x8x128xf32> to vector<8x128xf32>
    %154 = vector.shape_cast %151 : vector<8x128xf32> to vector<1x8x128xf32>
    tpu.vector_store %arg5[%c7, %c0_81, %c0_82], %154 {strides = array<i32>} : memref<10x8x128xf32, #tpu.memory_space<vmem>>, vector<1x8x128xf32>,
    %155 = vector.extract_strided_slice %87 {offsets = [64, 0], sizes = [8, 128], strides = [1, 1]} : vector<88x128xf32> to vector<8x128xf32>
    %156 = vector.extract_strided_slice %87 {offsets = [72, 0], sizes = [8, 128], strides = [1, 1]} : vector<88x128xf32> to vector<8x128xf32>
    %157 = arith.subf %156, %155 : vector<8x128xf32>
    %cst_83 = arith.constant 0.888888895 : f32
    %158 = vector.broadcast %cst_83 : f32 to vector<8x128xf32>
    %159 = arith.mulf %158, %157 : vector<8x128xf32>
    %160 = arith.addf %155, %159 : vector<8x128xf32>
    %c8_84 = arith.constant 8 : index
    %c0_85 = arith.constant 0 : index
    %c0_86 = arith.constant 0 : index
    %161 = vector.load %arg5[%c8_84, %c0_85, %c0_86] : memref<10x8x128xf32, #tpu.memory_space<vmem>>, vector<1x8x128xf32>
    %162 = vector.shape_cast %161 : vector<1x8x128xf32> to vector<8x128xf32>
    %163 = vector.shape_cast %160 : vector<8x128xf32> to vector<1x8x128xf32>
    tpu.vector_store %arg5[%c8_84, %c0_85, %c0_86], %163 {strides = array<i32>} : memref<10x8x128xf32, #tpu.memory_space<vmem>>, vector<1x8x128xf32>,
    %164 = vector.extract_strided_slice %87 {offsets = [80, 0], sizes = [8, 128], strides = [1, 1]} : vector<88x128xf32> to vector<8x128xf32>
    %c9 = arith.constant 9 : index
    %c0_87 = arith.constant 0 : index
    %c0_88 = arith.constant 0 : index
    %165 = vector.load %arg5[%c9, %c0_87, %c0_88] : memref<10x8x128xf32, #tpu.memory_space<vmem>>, vector<1x8x128xf32>
    %166 = vector.shape_cast %165 : vector<1x8x128xf32> to vector<8x128xf32>
    %167 = vector.shape_cast %164 : vector<8x128xf32> to vector<1x8x128xf32>
    tpu.vector_store %arg5[%c9, %c0_87, %c0_88], %167 {strides = array<i32>} : memref<10x8x128xf32, #tpu.memory_space<vmem>>, vector<1x8x128xf32>,
    return
  }
}

</mosaic_0001>

<llo_original>
// kernel: neural_ode_var_forward.1
$region0: #{neural_ode_var_forward.1}
  #allocation0 [shape = 'u32[]', space=smem, size = 0x4, offset = 0x4, fixed_abs, tag = 'smem constant byte address 0x4 - core index']
  #allocation1 [shape = 'u32[144,128]{1,0:T(1,128)}', space=vmem, size = 0x12000, scoped, tag = 'internal scratch']
  #allocation2 [shape = 'f32[88,32]{1,0:T(8,128)}', space=vmem, size = 0xb000, scoped, tag = 'scratch operand']
  %s0 = inlined_call_operand.vmem [shape: f32[8,32], index: 0, kind: input, shape index: {}]
  %s1 = inlined_call_operand.vmem [shape: f32[5,32,32], index: 1, kind: input, shape index: {}]
  %s2 = inlined_call_operand.vmem [shape: f32[5,1,32], index: 2, kind: input, shape index: {}]
  %s3 = inlined_call_operand.vmem [shape: f32[32,128], index: 3, kind: input, shape index: {}]
  %s4 = inlined_call_operand.vmem [shape: f32[1,128], index: 4, kind: input, shape index: {}]
  %s5 = inlined_call_operand.vmem [shape: f32[10,8,128], index: 5, kind: output, shape index: {}]
  %s6 = sld [smem:[#allocation0]]
  $region30: #{neural_ode_var_forward.1} parent=0
    _
  %s8 = ssub.s32 1, %s6
  %s9 = scalar_select 0, %s8, %s6
  // Predicated region
  $region2: #{neural_ode_var_forward.1} parent=0 // pred_check
    _
  $region3: #{neural_ode_var_forward.1} parent=0 // pred_check_branch
    %11 = sbr.rel (0) target = $region5
  $region4: #{neural_ode_var_forward.1} parent=0 // pred_region
    _
  $region5: #{neural_ode_var_forward.1} parent=0 // pred_fallthru
    _
  // Predicated region
  $region6: #{neural_ode_var_forward.1} parent=0 // pred_check
    _
  $region7: #{neural_ode_var_forward.1} parent=0 // pred_check_branch
    %13 = sbr.rel (0) target = $region9
  $region8: #{neural_ode_var_forward.1} parent=0 // pred_region
    _
  $region9: #{neural_ode_var_forward.1} parent=0 // pred_fallthru
    _
  // Predicated region
  $region10: #{neural_ode_var_forward.1} parent=0 // pred_check
    _
  $region11: #{neural_ode_var_forward.1} parent=0 // pred_check_branch
    %15 = sbr.rel (0) target = $region13
  $region12: #{neural_ode_var_forward.1} parent=0 // pred_region
    _
  $region13: #{neural_ode_var_forward.1} parent=0 // pred_fallthru
    _
  // Predicated region
  $region14: #{neural_ode_var_forward.1} parent=0 // pred_check
    _
  $region15: #{neural_ode_var_forward.1} parent=0 // pred_check_branch
    %17 = sbr.rel (0) target = $region17
  $region16: #{neural_ode_var_forward.1} parent=0 // pred_region
    _
  $region17: #{neural_ode_var_forward.1} parent=0 // pred_fallthru
    _
  // Predicated region
  $region18: #{neural_ode_var_forward.1} parent=0 // pred_check
    _
  $region19: #{neural_ode_var_forward.1} parent=0 // pred_check_branch
    %19 = sbr.rel (0) target = $region21
  $region20: #{neural_ode_var_forward.1} parent=0 // pred_region
    _
  $region21: #{neural_ode_var_forward.1} parent=0 // pred_fallthru
    _
  %v20 = vld [vmem:[%s0] sm:$0xff]
  %vm21 = vcmask 261120
  %22 = vst.msk [vmem:[#allocation2] sm:$0xff] %vm21, %v20
  %v23 = vld [vmem:[%s1] sm:$0xff]
  %v24 = vld [vmem:[%s1 + $0x8] sm:$0xff]
  %v25 = vld [vmem:[%s1 + $0x10] sm:$0xff]
  %v26 = vld [vmem:[%s1 + $0x18] sm:$0xff]
  %v27 = vld [vmem:[%s2] sm:$0x1]
  %v29 = vlaneseq
  %v30 = vshrl.u32 %v29, 7
  %v31 = vsub.s32 0, %v30
  %v32 = vrot.slane %v27, %v31
  %v34 = vtanh.pop %v20
  %v36 = vsel %vm21, %v34, 0
  %38 = vmatprep.subr.mxu0 0.0
  %39 = vmatpush1.msra.mxu0 0.0
  %40 = vmatprep.subr.mxu0 0.0
  %41 = vmatpush1.msra.mxu0 0.0
  %42 = vmatprep.subr.mxu0 0.0
  %43 = vmatpush1.msra.mxu0 0.0
  %44 = vmatprep.subr.mxu0 0.0
  %45 = vmatpush1.msra.mxu0 0.0
  %46 = vmatprep.subr.mxu0 0.0
  %47 = vmatpush1.msra.mxu0 0.0
  %48 = vmatprep.subr.mxu0 0.0
  %49 = vmatpush1.msra.mxu0 0.0
  %50 = vmatprep.subr.mxu0 0.0
  %51 = vmatpush1.msra.mxu0 0.0
  %52 = vmatprep.subr.mxu0 0.0
  %53 = vmatpush1.msra.mxu0 0.0
  %54 = vmatprep.subr.mxu0 0.0
  %55 = vmatpush1.msra.mxu0 0.0
  %56 = vmatprep.subr.mxu0 0.0
  %57 = vmatpush1.msra.mxu0 0.0
  %58 = vmatprep.subr.mxu0 0.0
  %59 = vmatpush1.msra.mxu0 0.0
  %60 = vmatprep.subr.mxu0 0.0
  %61 = vmatpush1.msra.mxu0 0.0
  %62 = vmatprep.subr.mxu0 0.0
  %63 = vmatpush1.msra.mxu0 %v26
  %64 = vmatprep.subr.mxu0 0.0
  %65 = vmatpush1.msra.mxu0 %v25
  %66 = vmatprep.subr.mxu0 0.0
  %67 = vmatpush1.msra.mxu0 %v24
  %68 = vmatprep.subr.mxu0 0.0
  %69 = vmatpush1.msra.mxu0 %v23
  %70 = vmatprep.subr.mxu0 0.0
  %71 = vmatpush2.msra.mxu0 0.0
  %72 = vmatprep.subr.mxu0 0.0
  %73 = vmatpush2.msra.mxu0 0.0
  %74 = vmatprep.subr.mxu0 0.0
  %75 = vmatpush2.msra.mxu0 0.0
  %76 = vmatprep.subr.mxu0 0.0
  %77 = vmatpush2.msra.mxu0 0.0
  %78 = vmatprep.subr.mxu0 0.0
  %79 = vmatpush2.msra.mxu0 0.0
  %80 = vmatprep.subr.mxu0 0.0
  %81 = vmatpush2.msra.mxu0 0.0
  %82 = vmatprep.subr.mxu0 0.0
  %83 = vmatpush2.msra.mxu0 0.0
  %84 = vmatprep.subr.mxu0 0.0
  %85 = vmatpush2.msra.mxu0 0.0
  %86 = vmatprep.subr.mxu0 0.0
  %87 = vmatpush2.msra.mxu0 0.0
  %88 = vmatprep.subr.mxu0 0.0
  %89 = vmatpush2.msra.mxu0 0.0
  %90 = vmatprep.subr.mxu0 0.0
  %91 = vmatpush2.msra.mxu0 0.0
  %92 = vmatprep.subr.mxu0 0.0
  %93 = vmatpush2.msra.mxu0 0.0
  %94 = vmatprep.subr.mxu0 0.0
  %95 = vmatpush2.msra.mxu0 0.0
  %96 = vmatprep.subr.mxu0 0.0
  %97 = vmatpush2.msra.mxu0 0.0
  %98 = vmatprep.subr.mxu0 0.0
  %99 = vmatpush2.msra.mxu0 0.0
  %100 = vmatprep.subr.mxu0 0.0
  %101 = vmatpush2.msra.mxu0 0.0
  %102 = vmatprep.mubr.f32.mxu0 0.0
  %103 = vmatmul.mubr.f32.gmra.mxu0 %v36
  %v104 = vpop.f32.mrf.mxu0
  %v105 = vadd.f32 %v32, %v104
  %v106 = vpop.f32.mrf.mxu0
  %107 = vdwg.mxu0
  %v108 = vadd.f32 %v20, %v105
  %109 = vst.msk [vmem:[#allocation2 + $0x8] sm:$0xff] %vm21, %v108
  %v110 = vtanh.pop %v108
  %v112 = vsel %vm21, %v110, 0
  %114 = vmatprep.subr.mxu0 0.0
  %115 = vmatpush1.msra.mxu0 0.0
  %116 = vmatprep.subr.mxu0 0.0
  %117 = vmatpush1.msra.mxu0 0.0
  %118 = vmatprep.subr.mxu0 0.0
  %119 = vmatpush1.msra.mxu0 0.0
  %120 = vmatprep.subr.mxu0 0.0
  %121 = vmatpush1.msra.mxu0 0.0
  %122 = vmatprep.subr.mxu0 0.0
  %123 = vmatpush1.msra.mxu0 0.0
  %124 = vmatprep.subr.mxu0 0.0
  %125 = vmatpush1.msra.mxu0 0.0
  %126 = vmatprep.subr.mxu0 0.0
  %127 = vmatpush1.msra.mxu0 0.0
  %128 = vmatprep.subr.mxu0 0.0
  %129 = vmatpush1.msra.mxu0 0.0
  %130 = vmatprep.subr.mxu0 0.0
  %131 = vmatpush1.msra.mxu0 0.0
  %132 = vmatprep.subr.mxu0 0.0
  %133 = vmatpush1.msra.mxu0 0.0
  %134 = vmatprep.subr.mxu0 0.0
  %135 = vmatpush1.msra.mxu0 0.0
  %136 = vmatprep.subr.mxu0 0.0
  %137 = vmatpush1.msra.mxu0 0.0
  %138 = vmatprep.subr.mxu0 0.0
  %139 = vmatpush1.msra.mxu0 %v26
  %140 = vmatprep.subr.mxu0 0.0
  %141 = vmatpush1.msra.mxu0 %v25
  %142 = vmatprep.subr.mxu0 0.0
  %143 = vmatpush1.msra.mxu0 %v24
  %144 = vmatprep.subr.mxu0 0.0
  %145 = vmatpush1.msra.mxu0 %v23
  %146 = vmatprep.subr.mxu0 0.0
  %147 = vmatpush2.msra.mxu0 0.0
  %148 = vmatprep.subr.mxu0 0.0
  %149 = vmatpush2.msra.mxu0 0.0
  %150 = vmatprep.subr.mxu0 0.0
  %151 = vmatpush2.msra.mxu0 0.0
  %152 = vmatprep.subr.mxu0 0.0
  %153 = vmatpush2.msra.mxu0 0.0
  %154 = vmatprep.subr.mxu0 0.0
  %155 = vmatpush2.msra.mxu0 0.0
  %156 = vmatprep.subr.mxu0 0.0
  %157 = vmatpush2.msra.mxu0 0.0
  %158 = vmatprep.subr.mxu0 0.0
  %159 = vmatpush2.msra.mxu0 0.0
  %160 = vmatprep.subr.mxu0 0.0
  %161 = vmatpush2.msra.mxu0 0.0
  %162 = vmatprep.subr.mxu0 0.0
  %163 = vmatpush2.msra.mxu0 0.0
  %164 = vmatprep.subr.mxu0 0.0
  %165 = vmatpush2.msra.mxu0 0.0
  %166 = vmatprep.subr.mxu0 0.0
  %167 = vmatpush2.msra.mxu0 0.0
  %168 = vmatprep.subr.mxu0 0.0
  %169 = vmatpush2.msra.mxu0 0.0
  %170 = vmatprep.subr.mxu0 0.0
  %171 = vmatpush2.msra.mxu0 0.0
  %172 = vmatprep.subr.mxu0 0.0
  %173 = vmatpush2.msra.mxu0 0.0
  %174 = vmatprep.subr.mxu0 0.0
  %175 = vmatpush2.msra.mxu0 0.0
  %176 = vmatprep.subr.mxu0 0.0
  %177 = vmatpush2.msra.mxu0 0.0
  %178 = vmatprep.mubr.f32.mxu0 0.0
  %179 = vmatmul.mubr.f32.gmra.mxu0 %v112
  %v180 = vpop.f32.mrf.mxu0
  %v181 = vadd.f32 %v32, %v180
  %v182 = vpop.f32.mrf.mxu0
  %183 = vdwg.mxu0
  %v184 = vadd.f32 %v108, %v181
  %185 = vst.msk [vmem:[#allocation2 + $0x10] sm:$0xff] %vm21, %v184
  %s186 = scalar_lea.vmem %s1, 32
  %v187 = vld [vmem:[%s186] sm:$0xff]
  %v188 = vld [vmem:[%s186 + $0x8] sm:$0xff]
  %v189 = vld [vmem:[%s186 + $0x10] sm:$0xff]
  %v190 = vld [vmem:[%s186 + $0x18] sm:$0xff]
  %s191 = scalar_lea.vmem %s2, 1
  %v192 = vld [vmem:[%s191] sm:$0x1]
  %v194 = vlaneseq
  %v195 = vshrl.u32 %v194, 7
  %v196 = vsub.s32 0, %v195
  %v197 = vrot.slane %v192, %v196
  %v199 = vtanh.pop %v184
  %v201 = vsel %vm21, %v199, 0
  %203 = vmatprep.subr.mxu0 0.0
  %204 = vmatpush1.msra.mxu0 0.0
  %205 = vmatprep.subr.mxu0 0.0
  %206 = vmatpush1.msra.mxu0 0.0
  %207 = vmatprep.subr.mxu0 0.0
  %208 = vmatpush1.msra.mxu0 0.0
  %209 = vmatprep.subr.mxu0 0.0
  %210 = vmatpush1.msra.mxu0 0.0
  %211 = vmatprep.subr.mxu0 0.0
  %212 = vmatpush1.msra.mxu0 0.0
  %213 = vmatprep.subr.mxu0 0.0
  %214 = vmatpush1.msra.mxu0 0.0
  %215 = vmatprep.subr.mxu0 0.0
  %216 = vmatpush1.msra.mxu0 0.0
  %217 = vmatprep.subr.mxu0 0.0
  %218 = vmatpush1.msra.mxu0 0.0
  %219 = vmatprep.subr.mxu0 0.0
  %220 = vmatpush1.msra.mxu0 0.0
  %221 = vmatprep.subr.mxu0 0.0
  %222 = vmatpush1.msra.mxu0 0.0
  %223 = vmatprep.subr.mxu0 0.0
  %224 = vmatpush1.msra.mxu0 0.0
  %225 = vmatprep.subr.mxu0 0.0
  %226 = vmatpush1.msra.mxu0 0.0
  %227 = vmatprep.subr.mxu0 0.0
  %228 = vmatpush1.msra.mxu0 %v190
  %229 = vmatprep.subr.mxu0 0.0
  %230 = vmatpush1.msra.mxu0 %v189
  %231 = vmatprep.subr.mxu0 0.0
  %232 = vmatpush1.msra.mxu0 %v188
  %233 = vmatprep.subr.mxu0 0.0
  %234 = vmatpush1.msra.mxu0 %v187
  %235 = vmatprep.subr.mxu0 0.0
  %236 = vmatpush2.msra.mxu0 0.0
  %237 = vmatprep.subr.mxu0 0.0
  %238 = vmatpush2.msra.mxu0 0.0
  %239 = vmatprep.subr.mxu0 0.0
  %240 = vmatpush2.msra.mxu0 0.0
  %241 = vmatprep.subr.mxu0 0.0
  %242 = vmatpush2.msra.mxu0 0.0
  %243 = vmatprep.subr.mxu0 0.0
  %244 = vmatpush2.msra.mxu0 0.0
  %245 = vmatprep.subr.mxu0 0.0
  %246 = vmatpush2.msra.mxu0 0.0
  %247 = vmatprep.subr.mxu0 0.0
  %248 = vmatpush2.msra.mxu0 0.0
  %249 = vmatprep.subr.mxu0 0.0
  %250 = vmatpush2.msra.mxu0 0.0
  %251 = vmatprep.subr.mxu0 0.0
  %252 = vmatpush2.msra.mxu0 0.0
  %253 = vmatprep.subr.mxu0 0.0
  %254 = vmatpush2.msra.mxu0 0.0
  %255 = vmatprep.subr.mxu0 0.0
  %256 = vmatpush2.msra.mxu0 0.0
  %257 = vmatprep.subr.mxu0 0.0
  %258 = vmatpush2.msra.mxu0 0.0
  %259 = vmatprep.subr.mxu0 0.0
  %260 = vmatpush2.msra.mxu0 0.0
  %261 = vmatprep.subr.mxu0 0.0
  %262 = vmatpush2.msra.mxu0 0.0
  %263 = vmatprep.subr.mxu0 0.0
  %264 = vmatpush2.msra.mxu0 0.0
  %265 = vmatprep.subr.mxu0 0.0
  %266 = vmatpush2.msra.mxu0 0.0
  %267 = vmatprep.mubr.f32.mxu0 0.0
  %268 = vmatmul.mubr.f32.gmra.mxu0 %v201
  %v269 = vpop.f32.mrf.mxu0
  %v270 = vadd.f32 %v197, %v269
  %v271 = vpop.f32.mrf.mxu0
  %272 = vdwg.mxu0
  %v273 = vadd.f32 %v184, %v270
  %274 = vst.msk [vmem:[#allocation2 + $0x18] sm:$0xff] %vm21, %v273
  %v275 = vtanh.pop %v273
  %v277 = vsel %vm21, %v275, 0
  %279 = vmatprep.subr.mxu0 0.0
  %280 = vmatpush1.msra.mxu0 0.0
  %281 = vmatprep.subr.mxu0 0.0
  %282 = vmatpush1.msra.mxu0 0.0
  %283 = vmatprep.subr.mxu0 0.0
  %284 = vmatpush1.msra.mxu0 0.0
  %285 = vmatprep.subr.mxu0 0.0
  %286 = vmatpush1.msra.mxu0 0.0
  %287 = vmatprep.subr.mxu0 0.0
  %288 = vmatpush1.msra.mxu0 0.0
  %289 = vmatprep.subr.mxu0 0.0
  %290 = vmatpush1.msra.mxu0 0.0
  %291 = vmatprep.subr.mxu0 0.0
  %292 = vmatpush1.msra.mxu0 0.0
  %293 = vmatprep.subr.mxu0 0.0
  %294 = vmatpush1.msra.mxu0 0.0
  %295 = vmatprep.subr.mxu0 0.0
  %296 = vmatpush1.msra.mxu0 0.0
  %297 = vmatprep.subr.mxu0 0.0
  %298 = vmatpush1.msra.mxu0 0.0
  %299 = vmatprep.subr.mxu0 0.0
  %300 = vmatpush1.msra.mxu0 0.0
  %301 = vmatprep.subr.mxu0 0.0
  %302 = vmatpush1.msra.mxu0 0.0
  %303 = vmatprep.subr.mxu0 0.0
  %304 = vmatpush1.msra.mxu0 %v190
  %305 = vmatprep.subr.mxu0 0.0
  %306 = vmatpush1.msra.mxu0 %v189
  %307 = vmatprep.subr.mxu0 0.0
  %308 = vmatpush1.msra.mxu0 %v188
  %309 = vmatprep.subr.mxu0 0.0
  %310 = vmatpush1.msra.mxu0 %v187
  %311 = vmatprep.subr.mxu0 0.0
  %312 = vmatpush2.msra.mxu0 0.0
  %313 = vmatprep.subr.mxu0 0.0
  %314 = vmatpush2.msra.mxu0 0.0
  %315 = vmatprep.subr.mxu0 0.0
  %316 = vmatpush2.msra.mxu0 0.0
  %317 = vmatprep.subr.mxu0 0.0
  %318 = vmatpush2.msra.mxu0 0.0
  %319 = vmatprep.subr.mxu0 0.0
  %320 = vmatpush2.msra.mxu0 0.0
  %321 = vmatprep.subr.mxu0 0.0
  %322 = vmatpush2.msra.mxu0 0.0
  %323 = vmatprep.subr.mxu0 0.0
  %324 = vmatpush2.msra.mxu0 0.0
  %325 = vmatprep.subr.mxu0 0.0
  %326 = vmatpush2.msra.mxu0 0.0
  %327 = vmatprep.subr.mxu0 0.0
  %328 = vmatpush2.msra.mxu0 0.0
  %329 = vmatprep.subr.mxu0 0.0
  %330 = vmatpush2.msra.mxu0 0.0
  %331 = vmatprep.subr.mxu0 0.0
  %332 = vmatpush2.msra.mxu0 0.0
  %333 = vmatprep.subr.mxu0 0.0
  %334 = vmatpush2.msra.mxu0 0.0
  %335 = vmatprep.subr.mxu0 0.0
  %336 = vmatpush2.msra.mxu0 0.0
  %337 = vmatprep.subr.mxu0 0.0
  %338 = vmatpush2.msra.mxu0 0.0
  %339 = vmatprep.subr.mxu0 0.0
  %340 = vmatpush2.msra.mxu0 0.0
  %341 = vmatprep.subr.mxu0 0.0
  %342 = vmatpush2.msra.mxu0 0.0
  %343 = vmatprep.mubr.f32.mxu0 0.0
  %344 = vmatmul.mubr.f32.gmra.mxu0 %v277
  %v345 = vpop.f32.mrf.mxu0
  %v346 = vadd.f32 %v197, %v345
  %v347 = vpop.f32.mrf.mxu0
  %348 = vdwg.mxu0
  %v349 = vadd.f32 %v273, %v346
  %350 = vst.msk [vmem:[#allocation2 + $0x20] sm:$0xff] %vm21, %v349
  %s351 = scalar_lea.vmem %s1, 64
  %v352 = vld [vmem:[%s351] sm:$0xff]
  %v353 = vld [vmem:[%s351 + $0x8] sm:$0xff]
  %v354 = vld [vmem:[%s351 + $0x10] sm:$0xff]
  %v355 = vld [vmem:[%s351 + $0x18] sm:$0xff]
  %s356 = scalar_lea.vmem %s2, 2
  %v357 = vld [vmem:[%s356] sm:$0x1]
  %v359 = vlaneseq
  %v360 = vshrl.u32 %v359, 7
  %v361 = vsub.s32 0, %v360
  %v362 = vrot.slane %v357, %v361
  %v364 = vtanh.pop %v349
  %v366 = vsel %vm21, %v364, 0
  %368 = vmatprep.subr.mxu0 0.0
  %369 = vmatpush1.msra.mxu0 0.0
  %370 = vmatprep.subr.mxu0 0.0
  %371 = vmatpush1.msra.mxu0 0.0
  %372 = vmatprep.subr.mxu0 0.0
  %373 = vmatpush1.msra.mxu0 0.0
  %374 = vmatprep.subr.mxu0 0.0
  %375 = vmatpush1.msra.mxu0 0.0
  %376 = vmatprep.subr.mxu0 0.0
  %377 = vmatpush1.msra.mxu0 0.0
  %378 = vmatprep.subr.mxu0 0.0
  %379 = vmatpush1.msra.mxu0 0.0
  %380 = vmatprep.subr.mxu0 0.0
  %381 = vmatpush1.msra.mxu0 0.0
  %382 = vmatprep.subr.mxu0 0.0
  %383 = vmatpush1.msra.mxu0 0.0
  %384 = vmatprep.subr.mxu0 0.0
  %385 = vmatpush1.msra.mxu0 0.0
  %386 = vmatprep.subr.mxu0 0.0
  %387 = vmatpush1.msra.mxu0 0.0
  %388 = vmatprep.subr.mxu0 0.0
  %389 = vmatpush1.msra.mxu0 0.0
  %390 = vmatprep.subr.mxu0 0.0
  %391 = vmatpush1.msra.mxu0 0.0
  %392 = vmatprep.subr.mxu0 0.0
  %393 = vmatpush1.msra.mxu0 %v355
  %394 = vmatprep.subr.mxu0 0.0
  %395 = vmatpush1.msra.mxu0 %v354
  %396 = vmatprep.subr.mxu0 0.0
  %397 = vmatpush1.msra.mxu0 %v353
  %398 = vmatprep.subr.mxu0 0.0
  %399 = vmatpush1.msra.mxu0 %v352
  %400 = vmatprep.subr.mxu0 0.0
  %401 = vmatpush2.msra.mxu0 0.0
  %402 = vmatprep.subr.mxu0 0.0
  %403 = vmatpush2.msra.mxu0 0.0
  %404 = vmatprep.subr.mxu0 0.0
  %405 = vmatpush2.msra.mxu0 0.0
  %406 = vmatprep.subr.mxu0 0.0
  %407 = vmatpush2.msra.mxu0 0.0
  %408 = vmatprep.subr.mxu0 0.0
  %409 = vmatpush2.msra.mxu0 0.0
  %410 = vmatprep.subr.mxu0 0.0
  %411 = vmatpush2.msra.mxu0 0.0
  %412 = vmatprep.subr.mxu0 0.0
  %413 = vmatpush2.msra.mxu0 0.0
  %414 = vmatprep.subr.mxu0 0.0
  %415 = vmatpush2.msra.mxu0 0.0
  %416 = vmatprep.subr.mxu0 0.0
  %417 = vmatpush2.msra.mxu0 0.0
  %418 = vmatprep.subr.mxu0 0.0
  %419 = vmatpush2.msra.mxu0 0.0
  %420 = vmatprep.subr.mxu0 0.0
  %421 = vmatpush2.msra.mxu0 0.0
  %422 = vmatprep.subr.mxu0 0.0
  %423 = vmatpush2.msra.mxu0 0.0
  %424 = vmatprep.subr.mxu0 0.0
  %425 = vmatpush2.msra.mxu0 0.0
  %426 = vmatprep.subr.mxu0 0.0
  %427 = vmatpush2.msra.mxu0 0.0
  %428 = vmatprep.subr.mxu0 0.0
  %429 = vmatpush2.msra.mxu0 0.0
  %430 = vmatprep.subr.mxu0 0.0
  %431 = vmatpush2.msra.mxu0 0.0
  %432 = vmatprep.mubr.f32.mxu0 0.0
  %433 = vmatmul.mubr.f32.gmra.mxu0 %v366
  %v434 = vpop.f32.mrf.mxu0
  %v435 = vadd.f32 %v362, %v434
  %v436 = vpop.f32.mrf.mxu0
  %437 = vdwg.mxu0
  %v438 = vadd.f32 %v349, %v435
  %439 = vst.msk [vmem:[#allocation2 + $0x28] sm:$0xff] %vm21, %v438
  %v440 = vtanh.pop %v438
  %v442 = vsel %vm21, %v440, 0
  %444 = vmatprep.subr.mxu0 0.0
  %445 = vmatpush1.msra.mxu0 0.0
  %446 = vmatprep.subr.mxu0 0.0
  %447 = vmatpush1.msra.mxu0 0.0
  %448 = vmatprep.subr.mxu0 0.0
  %449 = vmatpush1.msra.mxu0 0.0
  %450 = vmatprep.subr.mxu0 0.0
  %451 = vmatpush1.msra.mxu0 0.0
  %452 = vmatprep.subr.mxu0 0.0
  %453 = vmatpush1.msra.mxu0 0.0
  %454 = vmatprep.subr.mxu0 0.0
  %455 = vmatpush1.msra.mxu0 0.0
  %456 = vmatprep.subr.mxu0 0.0
  %457 = vmatpush1.msra.mxu0 0.0
  %458 = vmatprep.subr.mxu0 0.0
  %459 = vmatpush1.msra.mxu0 0.0
  %460 = vmatprep.subr.mxu0 0.0
  %461 = vmatpush1.msra.mxu0 0.0
  %462 = vmatprep.subr.mxu0 0.0
  %463 = vmatpush1.msra.mxu0 0.0
  %464 = vmatprep.subr.mxu0 0.0
  %465 = vmatpush1.msra.mxu0 0.0
  %466 = vmatprep.subr.mxu0 0.0
  %467 = vmatpush1.msra.mxu0 0.0
  %468 = vmatprep.subr.mxu0 0.0
  %469 = vmatpush1.msra.mxu0 %v355
  %470 = vmatprep.subr.mxu0 0.0
  %471 = vmatpush1.msra.mxu0 %v354
  %472 = vmatprep.subr.mxu0 0.0
  %473 = vmatpush1.msra.mxu0 %v353
  %474 = vmatprep.subr.mxu0 0.0
  %475 = vmatpush1.msra.mxu0 %v352
  %476 = vmatprep.subr.mxu0 0.0
  %477 = vmatpush2.msra.mxu0 0.0
  %478 = vmatprep.subr.mxu0 0.0
  %479 = vmatpush2.msra.mxu0 0.0
  %480 = vmatprep.subr.mxu0 0.0
  %481 = vmatpush2.msra.mxu0 0.0
  %482 = vmatprep.subr.mxu0 0.0
  %483 = vmatpush2.msra.mxu0 0.0
  %484 = vmatprep.subr.mxu0 0.0
  %485 = vmatpush2.msra.mxu0 0.0
  %486 = vmatprep.subr.mxu0 0.0
  %487 = vmatpush2.msra.mxu0 0.0
  %488 = vmatprep.subr.mxu0 0.0
  %489 = vmatpush2.msra.mxu0 0.0
  %490 = vmatprep.subr.mxu0 0.0
  %491 = vmatpush2.msra.mxu0 0.0
  %492 = vmatprep.subr.mxu0 0.0
  %493 = vmatpush2.msra.mxu0 0.0
  %494 = vmatprep.subr.mxu0 0.0
  %495 = vmatpush2.msra.mxu0 0.0
  %496 = vmatprep.subr.mxu0 0.0
  %497 = vmatpush2.msra.mxu0 0.0
  %498 = vmatprep.subr.mxu0 0.0
  %499 = vmatpush2.msra.mxu0 0.0
  %500 = vmatprep.subr.mxu0 0.0
  %501 = vmatpush2.msra.mxu0 0.0
  %502 = vmatprep.subr.mxu0 0.0
  %503 = vmatpush2.msra.mxu0 0.0
  %504 = vmatprep.subr.mxu0 0.0
  %505 = vmatpush2.msra.mxu0 0.0
  %506 = vmatprep.subr.mxu0 0.0
  %507 = vmatpush2.msra.mxu0 0.0
  %508 = vmatprep.mubr.f32.mxu0 0.0
  %509 = vmatmul.mubr.f32.gmra.mxu0 %v442
  %v510 = vpop.f32.mrf.mxu0
  %v511 = vadd.f32 %v362, %v510
  %v512 = vpop.f32.mrf.mxu0
  %513 = vdwg.mxu0
  %v514 = vadd.f32 %v438, %v511
  %515 = vst.msk [vmem:[#allocation2 + $0x30] sm:$0xff] %vm21, %v514
  %s516 = scalar_lea.vmem %s1, 96
  %v517 = vld [vmem:[%s516] sm:$0xff]
  %v518 = vld [vmem:[%s516 + $0x8] sm:$0xff]
  %v519 = vld [vmem:[%s516 + $0x10] sm:$0xff]
  %v520 = vld [vmem:[%s516 + $0x18] sm:$0xff]
  %s521 = scalar_lea.vmem %s2, 3
  %v522 = vld [vmem:[%s521] sm:$0x1]
  %v524 = vlaneseq
  %v525 = vshrl.u32 %v524, 7
  %v526 = vsub.s32 0, %v525
  %v527 = vrot.slane %v522, %v526
  %v529 = vtanh.pop %v514
  %v531 = vsel %vm21, %v529, 0
  %533 = vmatprep.subr.mxu0 0.0
  %534 = vmatpush1.msra.mxu0 0.0
  %535 = vmatprep.subr.mxu0 0.0
  %536 = vmatpush1.msra.mxu0 0.0
  %537 = vmatprep.subr.mxu0 0.0
  %538 = vmatpush1.msra.mxu0 0.0
  %539 = vmatprep.subr.mxu0 0.0
  %540 = vmatpush1.msra.mxu0 0.0
  %541 = vmatprep.subr.mxu0 0.0
  %542 = vmatpush1.msra.mxu0 0.0
  %543 = vmatprep.subr.mxu0 0.0
  %544 = vmatpush1.msra.mxu0 0.0
  %545 = vmatprep.subr.mxu0 0.0
  %546 = vmatpush1.msra.mxu0 0.0
  %547 = vmatprep.subr.mxu0 0.0
  %548 = vmatpush1.msra.mxu0 0.0
  %549 = vmatprep.subr.mxu0 0.0
  %550 = vmatpush1.msra.mxu0 0.0
  %551 = vmatprep.subr.mxu0 0.0
  %552 = vmatpush1.msra.mxu0 0.0
  %553 = vmatprep.subr.mxu0 0.0
  %554 = vmatpush1.msra.mxu0 0.0
  %555 = vmatprep.subr.mxu0 0.0
  %556 = vmatpush1.msra.mxu0 0.0
  %557 = vmatprep.subr.mxu0 0.0
  %558 = vmatpush1.msra.mxu0 %v520
  %559 = vmatprep.subr.mxu0 0.0
  %560 = vmatpush1.msra.mxu0 %v519
  %561 = vmatprep.subr.mxu0 0.0
  %562 = vmatpush1.msra.mxu0 %v518
  %563 = vmatprep.subr.mxu0 0.0
  %564 = vmatpush1.msra.mxu0 %v517
  %565 = vmatprep.subr.mxu0 0.0
  %566 = vmatpush2.msra.mxu0 0.0
  %567 = vmatprep.subr.mxu0 0.0
  %568 = vmatpush2.msra.mxu0 0.0
  %569 = vmatprep.subr.mxu0 0.0
  %570 = vmatpush2.msra.mxu0 0.0
  %571 = vmatprep.subr.mxu0 0.0
  %572 = vmatpush2.msra.mxu0 0.0
  %573 = vmatprep.subr.mxu0 0.0
  %574 = vmatpush2.msra.mxu0 0.0
  %575 = vmatprep.subr.mxu0 0.0
  %576 = vmatpush2.msra.mxu0 0.0
  %577 = vmatprep.subr.mxu0 0.0
  %578 = vmatpush2.msra.mxu0 0.0
  %579 = vmatprep.subr.mxu0 0.0
  %580 = vmatpush2.msra.mxu0 0.0
  %581 = vmatprep.subr.mxu0 0.0
  %582 = vmatpush2.msra.mxu0 0.0
  %583 = vmatprep.subr.mxu0 0.0
  %584 = vmatpush2.msra.mxu0 0.0
  %585 = vmatprep.subr.mxu0 0.0
  %586 = vmatpush2.msra.mxu0 0.0
  %587 = vmatprep.subr.mxu0 0.0
  %588 = vmatpush2.msra.mxu0 0.0
  %589 = vmatprep.subr.mxu0 0.0
  %590 = vmatpush2.msra.mxu0 0.0
  %591 = vmatprep.subr.mxu0 0.0
  %592 = vmatpush2.msra.mxu0 0.0
  %593 = vmatprep.subr.mxu0 0.0
  %594 = vmatpush2.msra.mxu0 0.0
  %595 = vmatprep.subr.mxu0 0.0
  %596 = vmatpush2.msra.mxu0 0.0
  %597 = vmatprep.mubr.f32.mxu0 0.0
  %598 = vmatmul.mubr.f32.gmra.mxu0 %v531
  %v599 = vpop.f32.mrf.mxu0
  %v600 = vadd.f32 %v527, %v599
  %v601 = vpop.f32.mrf.mxu0
  %602 = vdwg.mxu0
  %v603 = vadd.f32 %v514, %v600
  %604 = vst.msk [vmem:[#allocation2 + $0x38] sm:$0xff] %vm21, %v603
  %v605 = vtanh.pop %v603
  %v607 = vsel %vm21, %v605, 0
  %609 = vmatprep.subr.mxu0 0.0
  %610 = vmatpush1.msra.mxu0 0.0
  %611 = vmatprep.subr.mxu0 0.0
  %612 = vmatpush1.msra.mxu0 0.0
  %613 = vmatprep.subr.mxu0 0.0
  %614 = vmatpush1.msra.mxu0 0.0
  %615 = vmatprep.subr.mxu0 0.0
  %616 = vmatpush1.msra.mxu0 0.0
  %617 = vmatprep.subr.mxu0 0.0
  %618 = vmatpush1.msra.mxu0 0.0
  %619 = vmatprep.subr.mxu0 0.0
  %620 = vmatpush1.msra.mxu0 0.0
  %621 = vmatprep.subr.mxu0 0.0
  %622 = vmatpush1.msra.mxu0 0.0
  %623 = vmatprep.subr.mxu0 0.0
  %624 = vmatpush1.msra.mxu0 0.0
  %625 = vmatprep.subr.mxu0 0.0
  %626 = vmatpush1.msra.mxu0 0.0
  %627 = vmatprep.subr.mxu0 0.0
  %628 = vmatpush1.msra.mxu0 0.0
  %629 = vmatprep.subr.mxu0 0.0
  %630 = vmatpush1.msra.mxu0 0.0
  %631 = vmatprep.subr.mxu0 0.0
  %632 = vmatpush1.msra.mxu0 0.0
  %633 = vmatprep.subr.mxu0 0.0
  %634 = vmatpush1.msra.mxu0 %v520
  %635 = vmatprep.subr.mxu0 0.0
  %636 = vmatpush1.msra.mxu0 %v519
  %637 = vmatprep.subr.mxu0 0.0
  %638 = vmatpush1.msra.mxu0 %v518
  %639 = vmatprep.subr.mxu0 0.0
  %640 = vmatpush1.msra.mxu0 %v517
  %641 = vmatprep.subr.mxu0 0.0
  %642 = vmatpush2.msra.mxu0 0.0
  %643 = vmatprep.subr.mxu0 0.0
  %644 = vmatpush2.msra.mxu0 0.0
  %645 = vmatprep.subr.mxu0 0.0
  %646 = vmatpush2.msra.mxu0 0.0
  %647 = vmatprep.subr.mxu0 0.0
  %648 = vmatpush2.msra.mxu0 0.0
  %649 = vmatprep.subr.mxu0 0.0
  %650 = vmatpush2.msra.mxu0 0.0
  %651 = vmatprep.subr.mxu0 0.0
  %652 = vmatpush2.msra.mxu0 0.0
  %653 = vmatprep.subr.mxu0 0.0
  %654 = vmatpush2.msra.mxu0 0.0
  %655 = vmatprep.subr.mxu0 0.0
  %656 = vmatpush2.msra.mxu0 0.0
  %657 = vmatprep.subr.mxu0 0.0
  %658 = vmatpush2.msra.mxu0 0.0
  %659 = vmatprep.subr.mxu0 0.0
  %660 = vmatpush2.msra.mxu0 0.0
  %661 = vmatprep.subr.mxu0 0.0
  %662 = vmatpush2.msra.mxu0 0.0
  %663 = vmatprep.subr.mxu0 0.0
  %664 = vmatpush2.msra.mxu0 0.0
  %665 = vmatprep.subr.mxu0 0.0
  %666 = vmatpush2.msra.mxu0 0.0
  %667 = vmatprep.subr.mxu0 0.0
  %668 = vmatpush2.msra.mxu0 0.0
  %669 = vmatprep.subr.mxu0 0.0
  %670 = vmatpush2.msra.mxu0 0.0
  %671 = vmatprep.subr.mxu0 0.0
  %672 = vmatpush2.msra.mxu0 0.0
  %673 = vmatprep.mubr.f32.mxu0 0.0
  %674 = vmatmul.mubr.f32.gmra.mxu0 %v607
  %v675 = vpop.f32.mrf.mxu0
  %v676 = vadd.f32 %v527, %v675
  %v677 = vpop.f32.mrf.mxu0
  %678 = vdwg.mxu0
  %v679 = vadd.f32 %v603, %v676
  %680 = vst.msk [vmem:[#allocation2 + $0x40] sm:$0xff] %vm21, %v679
  %s681 = scalar_lea.vmem %s1, 128
  %v682 = vld [vmem:[%s681] sm:$0xff]
  %v683 = vld [vmem:[%s681 + $0x8] sm:$0xff]
  %v684 = vld [vmem:[%s681 + $0x10] sm:$0xff]
  %v685 = vld [vmem:[%s681 + $0x18] sm:$0xff]
  %s686 = scalar_lea.vmem %s2, 4
  %v687 = vld [vmem:[%s686] sm:$0x1]
  %v689 = vlaneseq
  %v690 = vshrl.u32 %v689, 7
  %v691 = vsub.s32 0, %v690
  %v692 = vrot.slane %v687, %v691
  %v694 = vtanh.pop %v679
  %v696 = vsel %vm21, %v694, 0
  %698 = vmatprep.subr.mxu0 0.0
  %699 = vmatpush1.msra.mxu0 0.0
  %700 = vmatprep.subr.mxu0 0.0
  %701 = vmatpush1.msra.mxu0 0.0
  %702 = vmatprep.subr.mxu0 0.0
  %703 = vmatpush1.msra.mxu0 0.0
  %704 = vmatprep.subr.mxu0 0.0
  %705 = vmatpush1.msra.mxu0 0.0
  %706 = vmatprep.subr.mxu0 0.0
  %707 = vmatpush1.msra.mxu0 0.0
  %708 = vmatprep.subr.mxu0 0.0
  %709 = vmatpush1.msra.mxu0 0.0
  %710 = vmatprep.subr.mxu0 0.0
  %711 = vmatpush1.msra.mxu0 0.0
  %712 = vmatprep.subr.mxu0 0.0
  %713 = vmatpush1.msra.mxu0 0.0
  %714 = vmatprep.subr.mxu0 0.0
  %715 = vmatpush1.msra.mxu0 0.0
  %716 = vmatprep.subr.mxu0 0.0
  %717 = vmatpush1.msra.mxu0 0.0
  %718 = vmatprep.subr.mxu0 0.0
  %719 = vmatpush1.msra.mxu0 0.0
  %720 = vmatprep.subr.mxu0 0.0
  %721 = vmatpush1.msra.mxu0 0.0
  %722 = vmatprep.subr.mxu0 0.0
  %723 = vmatpush1.msra.mxu0 %v685
  %724 = vmatprep.subr.mxu0 0.0
  %725 = vmatpush1.msra.mxu0 %v684
  %726 = vmatprep.subr.mxu0 0.0
  %727 = vmatpush1.msra.mxu0 %v683
  %728 = vmatprep.subr.mxu0 0.0
  %729 = vmatpush1.msra.mxu0 %v682
  %730 = vmatprep.subr.mxu0 0.0
  %731 = vmatpush2.msra.mxu0 0.0
  %732 = vmatprep.subr.mxu0 0.0
  %733 = vmatpush2.msra.mxu0 0.0
  %734 = vmatprep.subr.mxu0 0.0
  %735 = vmatpush2.msra.mxu0 0.0
  %736 = vmatprep.subr.mxu0 0.0
  %737 = vmatpush2.msra.mxu0 0.0
  %738 = vmatprep.subr.mxu0 0.0
  %739 = vmatpush2.msra.mxu0 0.0
  %740 = vmatprep.subr.mxu0 0.0
  %741 = vmatpush2.msra.mxu0 0.0
  %742 = vmatprep.subr.mxu0 0.0
  %743 = vmatpush2.msra.mxu0 0.0
  %744 = vmatprep.subr.mxu0 0.0
  %745 = vmatpush2.msra.mxu0 0.0
  %746 = vmatprep.subr.mxu0 0.0
  %747 = vmatpush2.msra.mxu0 0.0
  %748 = vmatprep.subr.mxu0 0.0
  %749 = vmatpush2.msra.mxu0 0.0
  %750 = vmatprep.subr.mxu0 0.0
  %751 = vmatpush2.msra.mxu0 0.0
  %752 = vmatprep.subr.mxu0 0.0
  %753 = vmatpush2.msra.mxu0 0.0
  %754 = vmatprep.subr.mxu0 0.0
  %755 = vmatpush2.msra.mxu0 0.0
  %756 = vmatprep.subr.mxu0 0.0
  %757 = vmatpush2.msra.mxu0 0.0
  %758 = vmatprep.subr.mxu0 0.0
  %759 = vmatpush2.msra.mxu0 0.0
  %760 = vmatprep.subr.mxu0 0.0
  %761 = vmatpush2.msra.mxu0 0.0
  %762 = vmatprep.mubr.f32.mxu0 0.0
  %763 = vmatmul.mubr.f32.gmra.mxu0 %v696
  %v764 = vpop.f32.mrf.mxu0
  %v765 = vadd.f32 %v692, %v764
  %v766 = vpop.f32.mrf.mxu0
  %767 = vdwg.mxu0
  %v768 = vadd.f32 %v679, %v765
  %769 = vst.msk [vmem:[#allocation2 + $0x48] sm:$0xff] %vm21, %v768
  %v770 = vtanh.pop %v768
  %v772 = vsel %vm21, %v770, 0
  %774 = vmatprep.subr.mxu0 0.0
  %775 = vmatpush1.msra.mxu0 0.0
  %776 = vmatprep.subr.mxu0 0.0
  %777 = vmatpush1.msra.mxu0 0.0
  %778 = vmatprep.subr.mxu0 0.0
  %779 = vmatpush1.msra.mxu0 0.0
  %780 = vmatprep.subr.mxu0 0.0
  %781 = vmatpush1.msra.mxu0 0.0
  %782 = vmatprep.subr.mxu0 0.0
  %783 = vmatpush1.msra.mxu0 0.0
  %784 = vmatprep.subr.mxu0 0.0
  %785 = vmatpush1.msra.mxu0 0.0
  %786 = vmatprep.subr.mxu0 0.0
  %787 = vmatpush1.msra.mxu0 0.0
  %788 = vmatprep.subr.mxu0 0.0
  %789 = vmatpush1.msra.mxu0 0.0
  %790 = vmatprep.subr.mxu0 0.0
  %791 = vmatpush1.msra.mxu0 0.0
  %792 = vmatprep.subr.mxu0 0.0
  %793 = vmatpush1.msra.mxu0 0.0
  %794 = vmatprep.subr.mxu0 0.0
  %795 = vmatpush1.msra.mxu0 0.0
  %796 = vmatprep.subr.mxu0 0.0
  %797 = vmatpush1.msra.mxu0 0.0
  %798 = vmatprep.subr.mxu0 0.0
  %799 = vmatpush1.msra.mxu0 %v685
  %800 = vmatprep.subr.mxu0 0.0
  %801 = vmatpush1.msra.mxu0 %v684
  %802 = vmatprep.subr.mxu0 0.0
  %803 = vmatpush1.msra.mxu0 %v683
  %804 = vmatprep.subr.mxu0 0.0
  %805 = vmatpush1.msra.mxu0 %v682
  %806 = vmatprep.subr.mxu0 0.0
  %807 = vmatpush2.msra.mxu0 0.0
  %808 = vmatprep.subr.mxu0 0.0
  %809 = vmatpush2.msra.mxu0 0.0
  %810 = vmatprep.subr.mxu0 0.0
  %811 = vmatpush2.msra.mxu0 0.0
  %812 = vmatprep.subr.mxu0 0.0
  %813 = vmatpush2.msra.mxu0 0.0
  %814 = vmatprep.subr.mxu0 0.0
  %815 = vmatpush2.msra.mxu0 0.0
  %816 = vmatprep.subr.mxu0 0.0
  %817 = vmatpush2.msra.mxu0 0.0
  %818 = vmatprep.subr.mxu0 0.0
  %819 = vmatpush2.msra.mxu0 0.0
  %820 = vmatprep.subr.mxu0 0.0
  %821 = vmatpush2.msra.mxu0 0.0
  %822 = vmatprep.subr.mxu0 0.0
  %823 = vmatpush2.msra.mxu0 0.0
  %824 = vmatprep.subr.mxu0 0.0
  %825 = vmatpush2.msra.mxu0 0.0
  %826 = vmatprep.subr.mxu0 0.0
  %827 = vmatpush2.msra.mxu0 0.0
  %828 = vmatprep.subr.mxu0 0.0
  %829 = vmatpush2.msra.mxu0 0.0
  %830 = vmatprep.subr.mxu0 0.0
  %831 = vmatpush2.msra.mxu0 0.0
  %832 = vmatprep.subr.mxu0 0.0
  %833 = vmatpush2.msra.mxu0 0.0
  %834 = vmatprep.subr.mxu0 0.0
  %835 = vmatpush2.msra.mxu0 0.0
  %836 = vmatprep.subr.mxu0 0.0
  %837 = vmatpush2.msra.mxu0 0.0
  %838 = vmatprep.mubr.f32.mxu0 0.0
  %839 = vmatmul.mubr.f32.gmra.mxu0 %v772
  %v840 = vpop.f32.mrf.mxu0
  %v841 = vadd.f32 %v692, %v840
  %v842 = vpop.f32.mrf.mxu0
  %843 = vdwg.mxu0
  %v844 = vadd.f32 %v768, %v841
  %845 = vst.msk [vmem:[#allocation2 + $0x50] sm:$0xff] %vm21, %v844
  %v846 = vld [vmem:[%s3] sm:$0xff]
  %v847 = vld [vmem:[%s3 + $0x8] sm:$0xff]
  %v848 = vld [vmem:[%s3 + $0x10] sm:$0xff]
  %v849 = vld [vmem:[%s3 + $0x18] sm:$0xff]
  %v850 = vld [vmem:[%s4] sm:$0x1]
  %v851 = vld [vmem:[#allocation2] sm:$0xff]
  %v852 = vld [vmem:[#allocation2 + $0x8] sm:$0xff]
  %v853 = vld [vmem:[#allocation2 + $0x10] sm:$0xff]
  %v854 = vld [vmem:[#allocation2 + $0x18] sm:$0xff]
  %v855 = vld [vmem:[#allocation2 + $0x20] sm:$0xff]
  %v856 = vld [vmem:[#allocation2 + $0x28] sm:$0xff]
  %v857 = vld [vmem:[#allocation2 + $0x30] sm:$0xff]
  %v858 = vld [vmem:[#allocation2 + $0x38] sm:$0xff]
  %v859 = vld [vmem:[#allocation2 + $0x40] sm:$0xff]
  %v860 = vld [vmem:[#allocation2 + $0x48] sm:$0xff]
  %v861 = vld [vmem:[#allocation2 + $0x50] sm:$0xff]
  %v863 = vlaneseq
  %v864 = vshrl.u32 %v863, 7
  %v865 = vsub.s32 0, %v864
  %v866 = vrot.slane %v850, %v865
  %v869 = vsel %vm21, %v851, 0
  %v872 = vsel %vm21, %v852, 0
  %v875 = vsel %vm21, %v853, 0
  %v878 = vsel %vm21, %v854, 0
  %v881 = vsel %vm21, %v855, 0
  %v884 = vsel %vm21, %v856, 0
  %v887 = vsel %vm21, %v857, 0
  %v890 = vsel %vm21, %v858, 0
  %v893 = vsel %vm21, %v859, 0
  %v896 = vsel %vm21, %v860, 0
  %v899 = vsel %vm21, %v861, 0
  %901 = vmatprep.subr.mxu0 0.0
  %902 = vmatpush1.msra.mxu0 0.0
  %903 = vmatprep.subr.mxu0 0.0
  %904 = vmatpush1.msra.mxu0 0.0
  %905 = vmatprep.subr.mxu0 0.0
  %906 = vmatpush1.msra.mxu0 0.0
  %907 = vmatprep.subr.mxu0 0.0
  %908 = vmatpush1.msra.mxu0 0.0
  %909 = vmatprep.subr.mxu0 0.0
  %910 = vmatpush1.msra.mxu0 0.0
  %911 = vmatprep.subr.mxu0 0.0
  %912 = vmatpush1.msra.mxu0 0.0
  %913 = vmatprep.subr.mxu0 0.0
  %914 = vmatpush1.msra.mxu0 0.0
  %915 = vmatprep.subr.mxu0 0.0
  %916 = vmatpush1.msra.mxu0 0.0
  %917 = vmatprep.subr.mxu0 0.0
  %918 = vmatpush1.msra.mxu0 0.0
  %919 = vmatprep.subr.mxu0 0.0
  %920 = vmatpush1.msra.mxu0 0.0
  %921 = vmatprep.subr.mxu0 0.0
  %922 = vmatpush1.msra.mxu0 0.0
  %923 = vmatprep.subr.mxu0 0.0
  %924 = vmatpush1.msra.mxu0 0.0
  %925 = vmatprep.subr.mxu0 0.0
  %926 = vmatpush1.msra.mxu0 %v849
  %927 = vmatprep.subr.mxu0 0.0
  %928 = vmatpush1.msra.mxu0 %v848
  %929 = vmatprep.subr.mxu0 0.0
  %930 = vmatpush1.msra.mxu0 %v847
  %931 = vmatprep.subr.mxu0 0.0
  %932 = vmatpush1.msra.mxu0 %v846
  %933 = vmatprep.subr.mxu0 0.0
  %934 = vmatpush2.msra.mxu0 0.0
  %935 = vmatprep.subr.mxu0 0.0
  %936 = vmatpush2.msra.mxu0 0.0
  %937 = vmatprep.subr.mxu0 0.0
  %938 = vmatpush2.msra.mxu0 0.0
  %939 = vmatprep.subr.mxu0 0.0
  %940 = vmatpush2.msra.mxu0 0.0
  %941 = vmatprep.subr.mxu0 0.0
  %942 = vmatpush2.msra.mxu0 0.0
  %943 = vmatprep.subr.mxu0 0.0
  %944 = vmatpush2.msra.mxu0 0.0
  %945 = vmatprep.subr.mxu0 0.0
  %946 = vmatpush2.msra.mxu0 0.0
  %947 = vmatprep.subr.mxu0 0.0
  %948 = vmatpush2.msra.mxu0 0.0
  %949 = vmatprep.subr.mxu0 0.0
  %950 = vmatpush2.msra.mxu0 0.0
  %951 = vmatprep.subr.mxu0 0.0
  %952 = vmatpush2.msra.mxu0 0.0
  %953 = vmatprep.subr.mxu0 0.0
  %954 = vmatpush2.msra.mxu0 0.0
  %955 = vmatprep.subr.mxu0 0.0
  %956 = vmatpush2.msra.mxu0 0.0
  %957 = vmatprep.subr.mxu0 0.0
  %958 = vmatpush2.msra.mxu0 0.0
  %959 = vmatprep.subr.mxu0 0.0
  %960 = vmatpush2.msra.mxu0 0.0
  %961 = vmatprep.subr.mxu0 0.0
  %962 = vmatpush2.msra.mxu0 0.0
  %963 = vmatprep.subr.mxu0 0.0
  %964 = vmatpush2.msra.mxu0 0.0
  %965 = vmatprep.mubr.f32.mxu0 0.0
  %966 = vmatmul.mubr.f32.gmra.mxu0 %v869
  %v967 = vpop.f32.mrf.mxu0
  %v968 = vadd.f32 %v866, %v967
  %v969 = vpop.f32.mrf.mxu0
  %970 = vmatprep.mubr.f32.mxu0 0.0
  %971 = vmatmul.mubr.f32.gmra.mxu0 %v872
  %v972 = vpop.f32.mrf.mxu0
  %v973 = vadd.f32 %v866, %v972
  %v974 = vpop.f32.mrf.mxu0
  %975 = vmatprep.mubr.f32.mxu0 0.0
  %976 = vmatmul.mubr.f32.gmra.mxu0 %v875
  %v977 = vpop.f32.mrf.mxu0
  %v978 = vadd.f32 %v866, %v977
  %v979 = vpop.f32.mrf.mxu0
  %980 = vmatprep.mubr.f32.mxu0 0.0
  %981 = vmatmul.mubr.f32.gmra.mxu0 %v878
  %v982 = vpop.f32.mrf.mxu0
  %v983 = vadd.f32 %v866, %v982
  %v984 = vpop.f32.mrf.mxu0
  %985 = vmatprep.mubr.f32.mxu0 0.0
  %986 = vmatmul.mubr.f32.gmra.mxu0 %v881
  %v987 = vpop.f32.mrf.mxu0
  %v988 = vadd.f32 %v866, %v987
  %v989 = vpop.f32.mrf.mxu0
  %990 = vmatprep.mubr.f32.mxu0 0.0
  %991 = vmatmul.mubr.f32.gmra.mxu0 %v884
  %v992 = vpop.f32.mrf.mxu0
  %v993 = vadd.f32 %v866, %v992
  %v994 = vpop.f32.mrf.mxu0
  %995 = vmatprep.mubr.f32.mxu0 0.0
  %996 = vmatmul.mubr.f32.gmra.mxu0 %v887
  %v997 = vpop.f32.mrf.mxu0
  %v998 = vadd.f32 %v866, %v997
  %v999 = vpop.f32.mrf.mxu0
  %1000 = vmatprep.mubr.f32.mxu0 0.0
  %1001 = vmatmul.mubr.f32.gmra.mxu0 %v890
  %v1002 = vpop.f32.mrf.mxu0
  %v1003 = vadd.f32 %v866, %v1002
  %v1004 = vpop.f32.mrf.mxu0
  %1005 = vmatprep.mubr.f32.mxu0 0.0
  %1006 = vmatmul.mubr.f32.gmra.mxu0 %v893
  %v1007 = vpop.f32.mrf.mxu0
  %v1008 = vadd.f32 %v866, %v1007
  %v1009 = vpop.f32.mrf.mxu0
  %1010 = vmatprep.mubr.f32.mxu0 0.0
  %1011 = vmatmul.mubr.f32.gmra.mxu0 %v896
  %v1012 = vpop.f32.mrf.mxu0
  %v1013 = vadd.f32 %v866, %v1012
  %v1014 = vpop.f32.mrf.mxu0
  %1015 = vmatprep.mubr.f32.mxu0 0.0
  %1016 = vmatmul.mubr.f32.gmra.mxu0 %v899
  %v1017 = vpop.f32.mrf.mxu0
  %v1018 = vadd.f32 %v866, %v1017
  %v1019 = vpop.f32.mrf.mxu0
  %1020 = vdwg.mxu0
  %1021 = vst [vmem:[%s5] sm:$0xff] %v968
  %v1022 = vsub.f32 %v978, %v973
  %v1023 = vmul.f32 %v1022, 0.11111111
  %v1024 = vadd.f32 %v973, %v1023
  %s1025 = scalar_lea.vmem %s5, 8
  %1026 = vst [vmem:[%s1025] sm:$0xff] %v1024
  %v1027 = vsub.f32 %v983, %v978
  %v1028 = vmul.f32 %v1027, 0.22222222
  %v1029 = vadd.f32 %v978, %v1028
  %s1030 = scalar_lea.vmem %s5, 16
  %1031 = vst [vmem:[%s1030] sm:$0xff] %v1029
  %v1032 = vsub.f32 %v988, %v983
  %v1033 = vmul.f32 %v1032, 0.33333334
  %v1034 = vadd.f32 %v983, %v1033
  %s1035 = scalar_lea.vmem %s5, 24
  %1036 = vst [vmem:[%s1035] sm:$0xff] %v1034
  %v1037 = vsub.f32 %v993, %v988
  %v1038 = vmul.f32 %v1037, 0.44444445
  %v1039 = vadd.f32 %v988, %v1038
  %s1040 = scalar_lea.vmem %s5, 32
  %1041 = vst [vmem:[%s1040] sm:$0xff] %v1039
  %v1042 = vsub.f32 %v998, %v993
  %v1043 = vmul.f32 %v1042, 0.5555556
  %v1044 = vadd.f32 %v993, %v1043
  %s1045 = scalar_lea.vmem %s5, 40
  %1046 = vst [vmem:[%s1045] sm:$0xff] %v1044
  %v1047 = vsub.f32 %v1003, %v998
  %v1048 = vmul.f32 %v1047, 0.6666667
  %v1049 = vadd.f32 %v998, %v1048
  %s1050 = scalar_lea.vmem %s5, 48
  %1051 = vst [vmem:[%s1050] sm:$0xff] %v1049
  %v1052 = vsub.f32 %v1008, %v1003
  %v1053 = vmul.f32 %v1052, 0.7777778
  %v1054 = vadd.f32 %v1003, %v1053
  %s1055 = scalar_lea.vmem %s5, 56
  %1056 = vst [vmem:[%s1055] sm:$0xff] %v1054
  %v1057 = vsub.f32 %v1013, %v1008
  %v1058 = vmul.f32 %v1057, 0.8888889
  %v1059 = vadd.f32 %v1008, %v1058
  %s1060 = scalar_lea.vmem %s5, 64
  %1061 = vst [vmem:[%s1060] sm:$0xff] %v1059
  %s1062 = scalar_lea.vmem %s5, 72
  %1063 = vst [vmem:[%s1062] sm:$0xff] %v1018
  // Predicated region
  $region22: #{neural_ode_var_forward.1} parent=0 // pred_check
    _
  $region23: #{neural_ode_var_forward.1} parent=0 // pred_check_branch
    %1065 = sbr.rel (0) target = $region25
  $region24: #{neural_ode_var_forward.1} parent=0 // pred_region
    _
  $region25: #{neural_ode_var_forward.1} parent=0 // pred_fallthru
    _
  // Predicated region
  $region26: #{neural_ode_var_forward.1} parent=0 // pred_check
    _
  $region27: #{neural_ode_var_forward.1} parent=0 // pred_check_branch
    %1067 = sbr.rel (0) target = $region29
  $region28: #{neural_ode_var_forward.1} parent=0 // pred_region
    _
  $region29: #{neural_ode_var_forward.1} parent=0 // pred_fallthru
    _

</llo_original>
